<compile_context>
chip_gen: v7x
topology: tpu7x:2x2x1
jax: 0.10.0
libtpu: 0.0.40
codegen_flags: <defaults>
</compile_context>

<pallas_src>
import jax
import jax.numpy as jnp
import numpy as np
from jax.experimental import pallas as pl
from jax.experimental.pallas import tpu as pltpu

LEAKY_SLOPE = 0.01  # nn.LeakyReLU default negative slope


# ----------------------------------------------------------------------------
# Pallas kernel: one grid step == one block of `T_blk` GRU time steps.
# ----------------------------------------------------------------------------
def gru_subnet_kernel(x_ref, wih_ref, whh_ref, bgi_ref, bhn_ref,
                      wfc_ref, bfc_ref, out_ref, h_ref, hs_ref):
    B, T_blk, in_c = x_ref.shape
    H = whh_ref.shape[0]
    out_c = wfc_ref.shape[1]

    @pl.when(pl.program_id(0) == 0)
    def _():
        h_ref[...] = jnp.zeros_like(h_ref)          # h_0 = 0 (PyTorch default)

    # ---- Phase 1: input projection for ALL steps of the block, one GEMM ----
    # gi[:, t] = x_t @ W_ih^T + b_ih (+ b_hh folded in for the r/z gates).
    x2d = x_ref[...].reshape(B * T_blk, in_c)
    gi_blk = (jnp.dot(x2d, wih_ref[...], preferred_element_type=jnp.float32)
              + bgi_ref[...]).reshape(B, T_blk, 3 * H)

    # ---- Phase 2: serial recurrence; only h @ W_hh^T remains per step ------
    whh = whh_ref[...]                               # [H, 3H]
    b_hn = bhn_ref[...]                              # [1, H]
    h = h_ref[...]                                   # [B, H]
    for t in range(T_blk):                           # static full unroll
        gi = gi_blk[:, t, :]                                         # [B, 3H]
        gh = jnp.dot(h, whh, preferred_element_type=jnp.float32)     # [B, 3H]
        # Gate slices are lane-tile aligned because H is a multiple of 128.
        r = jax.nn.sigmoid(gi[:, :H] + gh[:, :H])
        z = jax.nn.sigmoid(gi[:, H:2 * H] + gh[:, H:2 * H])
        n = jnp.tanh(gi[:, 2 * H:] + r * (gh[:, 2 * H:] + b_hn))
        h = (1.0 - z) * n + z * h
        hs_ref[:, t, :] = h                          # lane-dense (H) store
    h_ref[...] = h                                   # carry to next grid step

    # ---- Phase 3: FC + LeakyReLU for the whole block, one GEMM -------------
    hs2d = hs_ref[...].reshape(B * T_blk, H)
    y = (jnp.dot(hs2d, wfc_ref[...], preferred_element_type=jnp.float32)
         + bfc_ref[...])
    y = jnp.where(y > 0.0, y, LEAKY_SLOPE * y)
    out_ref[...] = y.reshape(B, T_blk, out_c).astype(out_ref.dtype)


# ----------------------------------------------------------------------------
# Wrapper
# ----------------------------------------------------------------------------
def gru_subnet_pallas(x, params, *, block_steps=None):
    """x: [B, N, T, C] float32 -> [B, N, out_c] float32."""
    W_ih, W_hh, b_ih, b_hh, W_fc, b_fc = params      # PyTorch-shaped params
    B, N, T, C = x.shape
    in_c = T * C
    hid = W_hh.shape[1]
    out_c = W_fc.shape[0]
    assert W_ih.shape == (3 * hid, in_c)
    # Perf note: hid % 128 == 0 keeps the gate slices lane-tile aligned.

    if block_steps is None:
        block_steps = N                              # whole sequence resident
    assert N % block_steps == 0
    n_blocks = N // block_steps
    # TODO(synk): for very long sequences, switch the in-kernel static unroll
    # to lax.fori_loop over a VMEM-staged gate buffer to bound code size.

    # Layout prep (no activation transposes): flatten features only.
    x_flat = x.reshape(B, N, in_c)                   # [B, N, in_c] (free)
    wih_t = jnp.transpose(W_ih)                      # [in_c, 3H]
    whh_t = jnp.transpose(W_hh)                      # [H,   3H]
    wfc_t = jnp.transpose(W_fc)                      # [H, out_c]
    # Fold b_ih and the r/z parts of b_hh into the precomputed gate bias; only
    # the n-gate part of b_hh must stay inside the recurrence (scaled by r).
    b_gi = (b_ih + jnp.concatenate(
        [b_hh[:2 * hid], jnp.zeros((hid,), b_hh.dtype)])).reshape(1, 3 * hid)
    b_hn = b_hh[2 * hid:].reshape(1, hid)
    bfc = b_fc.reshape(1, out_c)

    grid_spec = pltpu.PrefetchScalarGridSpec(
        num_scalar_prefetch=0,
        grid=(n_blocks,),
        in_specs=[
            pl.BlockSpec((B, block_steps, in_c), lambda i: (0, i, 0)),  # x blk
            pl.BlockSpec((in_c, 3 * hid), lambda i: (0, 0)),            # W_ih^T
            pl.BlockSpec((hid, 3 * hid), lambda i: (0, 0)),             # W_hh^T
            pl.BlockSpec((1, 3 * hid), lambda i: (0, 0)),               # b_gi
            pl.BlockSpec((1, hid), lambda i: (0, 0)),                   # b_hn
            pl.BlockSpec((hid, out_c), lambda i: (0, 0)),               # W_fc^T
            pl.BlockSpec((1, out_c), lambda i: (0, 0)),                 # b_fc
        ],
        out_specs=pl.BlockSpec((B, block_steps, out_c), lambda i: (0, i, 0)),
        scratch_shapes=[
            pltpu.VMEM((B, hid), jnp.float32),               # carried hidden h
            pltpu.VMEM((B, block_steps, hid), jnp.float32),  # per-block h's
        ],
    )

    return pl.pallas_call(
        gru_subnet_kernel,
        out_shape=jax.ShapeDtypeStruct((B, N, out_c), jnp.float32),
        grid_spec=grid_spec,
        compiler_params=pltpu.CompilerParams(
            dimension_semantics=("arbitrary",)),     # recurrence => sequential
    )(x_flat, wih_t, whh_t, b_gi, b_hn, wfc_t, bfc)
    # TODO(synk): on v7x (2 TensorCores) an extra "parallel" batch grid axis
    # (or pl.core_map) could split B across cores for ~2x serial latency.


# ----------------------------------------------------------------------------
# Pure-JAX reference (mirrors torch.nn.GRU + Linear + LeakyReLU)
# ----------------------------------------------------------------------------
def gru_subnet_ref(x, params):
    W_ih, W_hh, b_ih, b_hh, W_fc, b_fc = params
    B, N, T, C = x.shape
    hid = W_hh.shape[1]
    xs = x.reshape(B, N, T * C)
    hi = jax.lax.Precision.HIGHEST

    def step(h, xt):
        gi = jnp.dot(xt, W_ih.T, precision=hi) + b_ih
        gh = jnp.dot(h, W_hh.T, precision=hi) + b_hh
        i_r, i_z, i_n = jnp.split(gi, 3, axis=-1)
        h_r, h_z, h_n = jnp.split(gh, 3, axis=-1)
        r = jax.nn.sigmoid(i_r + h_r)
        z = jax.nn.sigmoid(i_z + h_z)
        n = jnp.tanh(i_n + r * h_n)
        h_new = (1.0 - z) * n + z * h
        return h_new, h_new

    h0 = jnp.zeros((B, hid), jnp.float32)
    _, hs = jax.lax.scan(step, h0, jnp.swapaxes(xs, 0, 1))   # [N, B, H]
    hs = jnp.swapaxes(hs, 0, 1)                              # [B, N, H]
    y = jnp.dot(hs, W_fc.T, precision=hi) + b_fc
    return jnp.where(y > 0, y, LEAKY_SLOPE * y)


# ----------------------------------------------------------------------------
def make_params(key, in_c, hid, out_c):
    """Deterministic synthetic params in PyTorch shapes (gate order r,z,n)."""
    ks = jax.random.split(key, 6)
    s = 1.0 / np.sqrt(hid)
    W_ih = jax.random.uniform(ks[0], (3 * hid, in_c), jnp.float32, -s, s)
    W_hh = jax.random.uniform(ks[1], (3 * hid, hid), jnp.float32, -s, s)
    b_ih = jax.random.uniform(ks[2], (3 * hid,), jnp.float32, -s, s)
    b_hh = jax.random.uniform(ks[3], (3 * hid,), jnp.float32, -s, s)
    W_fc = jax.random.uniform(ks[4], (out_c, hid), jnp.float32, -s, s)
    b_fc = jax.random.uniform(ks[5], (out_c,), jnp.float32, -s, s)
    return (W_ih, W_hh, b_ih, b_hh, W_fc, b_fc)


if __name__ == "__main__":
    # Small shapes: B=2 batch, N=8 sequence (nodes), T=4, C=8 -> in_c = 32.
    B, N, T, C = 2, 8, 4, 8
    in_c, hid, out_c = T * C, 128, 16

    key = jax.random.PRNGKey(0)
    kx, kp = jax.random.split(key)
    x = jax.random.normal(kx, (B, N, T, C), jnp.float32)
    params = make_params(kp, in_c, hid, out_c)

    out = jax.block_until_ready(gru_subnet_pallas(x, params))
    ref = jax.block_until_ready(gru_subnet_ref(x, params))

    assert out.shape == (B, N, out_c), out.shape
    np.testing.assert_allclose(np.asarray(out), np.asarray(ref),
                               rtol=1e-4, atol=1e-4)
    print("KERNEL_OK")
</pallas_src>

<mosaic_0001>
module attributes {stable_mosaic.version = 11 : i64} {
  func.func @gru_subnet_kernel(%arg0: i32, %arg1: memref<2x8x32xf32, #tpu.memory_space<vmem>>, %arg2: memref<32x384xf32, #tpu.memory_space<vmem>>, %arg3: memref<128x384xf32, #tpu.memory_space<vmem>>, %arg4: memref<1x384xf32, #tpu.memory_space<vmem>>, %arg5: memref<1x128xf32, #tpu.memory_space<vmem>>, %arg6: memref<128x16xf32, #tpu.memory_space<vmem>>, %arg7: memref<1x16xf32, #tpu.memory_space<vmem>>, %arg8: memref<2x8x16xf32, #tpu.memory_space<vmem>>, %arg9: memref<2x128xf32, #tpu.memory_space<vmem>>, %arg10: memref<2x8x128xf32, #tpu.memory_space<vmem>>) attributes {dimension_semantics = [#tpu.dimension_semantics<arbitrary>], iteration_bounds = array<i64: 1>, scalar_prefetch = 0 : i64, scratch_operands = 2 : i64, tpu.core_type = #tpu.core_type<tc>, window_params = [{transform_indices = @transform_0, window_bounds = array<i64: 2, 8, 32>}, {pipeline_mode = #tpu.pipeline_mode<synchronous>, transform_indices = @transform_1, window_bounds = array<i64: 32, 384>}, {pipeline_mode = #tpu.pipeline_mode<synchronous>, transform_indices = @transform_2, window_bounds = array<i64: 128, 384>}, {pipeline_mode = #tpu.pipeline_mode<synchronous>, transform_indices = @transform_3, window_bounds = array<i64: 1, 384>}, {pipeline_mode = #tpu.pipeline_mode<synchronous>, transform_indices = @transform_4, window_bounds = array<i64: 1, 128>}, {pipeline_mode = #tpu.pipeline_mode<synchronous>, transform_indices = @transform_5, window_bounds = array<i64: 128, 16>}, {pipeline_mode = #tpu.pipeline_mode<synchronous>, transform_indices = @transform_6, window_bounds = array<i64: 1, 16>}, {transform_indices = @transform_7, window_bounds = array<i64: 2, 8, 16>}]} {
    %c0_i32 = arith.constant 0 : i32
    %0 = arith.cmpi eq, %arg0, %c0_i32 : i32
    %1 = arith.extui %0 : i1 to i32
    %c0_i32_0 = arith.constant 0 : i32
    %2 = arith.cmpi ne, %1, %c0_i32_0 : i32
    scf.if %2 {
      %cst_77 = arith.constant 0.000000e+00 : f32
      %301 = vector.broadcast %cst_77 : f32 to vector<2x128xf32>
      %c0_78 = arith.constant 0 : index
      %c0_79 = arith.constant 0 : index
      %302 = vector.load %arg9[%c0_78, %c0_79] : memref<2x128xf32, #tpu.memory_space<vmem>>, vector<2x128xf32>
      tpu.vector_store %arg9[%c0_78, %c0_79], %301 {strides = array<i32>} : memref<2x128xf32, #tpu.memory_space<vmem>>, vector<2x128xf32>,
    } else {
    }
    %c0 = arith.constant 0 : index
    %c0_1 = arith.constant 0 : index
    %c0_2 = arith.constant 0 : index
    %3 = vector.load %arg1[%c0, %c0_1, %c0_2] : memref<2x8x32xf32, #tpu.memory_space<vmem>>, vector<2x8x32xf32>
    %4 = vector.shape_cast %3 : vector<2x8x32xf32> to vector<16x32xf32>
    %c0_3 = arith.constant 0 : index
    %c0_4 = arith.constant 0 : index
    %5 = vector.load %arg2[%c0_3, %c0_4] : memref<32x384xf32, #tpu.memory_space<vmem>>, vector<32x384xf32>
    %cst = arith.constant dense<0.000000e+00> : vector<16x384xf32>
    %6 = tpu.matmul %4, %5, %cst {dimension_numbers = #tpu.dot_dimension_numbers<[1], [0], [0], [1], [0, 0, 1, 1], [], []>} : vector<16x32xf32>, vector<32x384xf32>, vector<16x384xf32> -> vector<16x384xf32>
    %c0_5 = arith.constant 0 : index
    %c0_6 = arith.constant 0 : index
    %7 = vector.load %arg4[%c0_5, %c0_6] : memref<1x384xf32, #tpu.memory_space<vmem>>, vector<1x384xf32>
    %8 = vector.broadcast %7 : vector<1x384xf32> to vector<16x384xf32>
    %9 = arith.addf %6, %8 : vector<16x384xf32>
    %10 = vector.shape_cast %9 : vector<16x384xf32> to vector<2x8x384xf32>
    %c0_7 = arith.constant 0 : index
    %c0_8 = arith.constant 0 : index
    %11 = vector.load %arg3[%c0_7, %c0_8] : memref<128x384xf32, #tpu.memory_space<vmem>>, vector<128x384xf32>
    %c0_9 = arith.constant 0 : index
    %c0_10 = arith.constant 0 : index
    %12 = vector.load %arg5[%c0_9, %c0_10] : memref<1x128xf32, #tpu.memory_space<vmem>>, vector<1x128xf32>
    %c0_11 = arith.constant 0 : index
    %c0_12 = arith.constant 0 : index
    %13 = vector.load %arg9[%c0_11, %c0_12] : memref<2x128xf32, #tpu.memory_space<vmem>>, vector<2x128xf32>
    %14 = vector.extract_strided_slice %10 {offsets = [0, 0, 0], sizes = [2, 1, 384], strides = [1, 1, 1]} : vector<2x8x384xf32> to vector<2x1x384xf32>
    %15 = vector.shape_cast %14 : vector<2x1x384xf32> to vector<2x384xf32>
    %cst_13 = arith.constant dense<0.000000e+00> : vector<2x384xf32>
    %16 = tpu.matmul %13, %11, %cst_13 {dimension_numbers = #tpu.dot_dimension_numbers<[1], [0], [0], [1], [0, 0, 1, 1], [], []>} : vector<2x128xf32>, vector<128x384xf32>, vector<2x384xf32> -> vector<2x384xf32>
    %17 = vector.extract_strided_slice %15 {offsets = [0, 0], sizes = [2, 128], strides = [1, 1]} : vector<2x384xf32> to vector<2x128xf32>
    %18 = vector.extract_strided_slice %16 {offsets = [0, 0], sizes = [2, 128], strides = [1, 1]} : vector<2x384xf32> to vector<2x128xf32>
    %19 = arith.addf %17, %18 : vector<2x128xf32>
    %20 = arith.negf %19 : vector<2x128xf32>
    %21 = math.exp %20 : vector<2x128xf32>
    %cst_14 = arith.constant 1.000000e+00 : f32
    %22 = vector.broadcast %cst_14 : f32 to vector<2x128xf32>
    %23 = arith.addf %22, %21 : vector<2x128xf32>
    %24 = arith.divf %22, %23 : vector<2x128xf32>
    %25 = vector.extract_strided_slice %15 {offsets = [0, 128], sizes = [2, 128], strides = [1, 1]} : vector<2x384xf32> to vector<2x128xf32>
    %26 = vector.extract_strided_slice %16 {offsets = [0, 128], sizes = [2, 128], strides = [1, 1]} : vector<2x384xf32> to vector<2x128xf32>
    %27 = arith.addf %25, %26 : vector<2x128xf32>
    %28 = arith.negf %27 : vector<2x128xf32>
    %29 = math.exp %28 : vector<2x128xf32>
    %cst_15 = arith.constant 1.000000e+00 : f32
    %30 = vector.broadcast %cst_15 : f32 to vector<2x128xf32>
    %31 = arith.addf %30, %29 : vector<2x128xf32>
    %32 = arith.divf %30, %31 : vector<2x128xf32>
    %33 = vector.extract_strided_slice %15 {offsets = [0, 256], sizes = [2, 128], strides = [1, 1]} : vector<2x384xf32> to vector<2x128xf32>
    %34 = vector.extract_strided_slice %16 {offsets = [0, 256], sizes = [2, 128], strides = [1, 1]} : vector<2x384xf32> to vector<2x128xf32>
    %35 = vector.broadcast %12 : vector<1x128xf32> to vector<2x128xf32>
    %36 = arith.addf %34, %35 : vector<2x128xf32>
    %37 = arith.mulf %24, %36 : vector<2x128xf32>
    %38 = arith.addf %33, %37 : vector<2x128xf32>
    %39 = math.tanh %38 : vector<2x128xf32>
    %cst_16 = arith.constant 1.000000e+00 : f32
    %40 = vector.broadcast %cst_16 : f32 to vector<2x128xf32>
    %41 = arith.subf %40, %32 : vector<2x128xf32>
    %42 = arith.mulf %41, %39 : vector<2x128xf32>
    %43 = arith.mulf %32, %13 : vector<2x128xf32>
    %44 = arith.addf %42, %43 : vector<2x128xf32>
    %c0_17 = arith.constant 0 : index
    %c0_18 = arith.constant 0 : index
    %c0_19 = arith.constant 0 : index
    %45 = vector.load %arg10[%c0_17, %c0_18, %c0_19] : memref<2x8x128xf32, #tpu.memory_space<vmem>>, vector<2x1x128xf32>
    %46 = vector.shape_cast %45 : vector<2x1x128xf32> to vector<2x128xf32>
    %47 = vector.shape_cast %44 : vector<2x128xf32> to vector<2x1x128xf32>
    tpu.vector_store %arg10[%c0_17, %c0_18, %c0_19], %47 {strides = array<i32>} : memref<2x8x128xf32, #tpu.memory_space<vmem>>, vector<2x1x128xf32>,
    %48 = vector.extract_strided_slice %10 {offsets = [0, 1, 0], sizes = [2, 1, 384], strides = [1, 1, 1]} : vector<2x8x384xf32> to vector<2x1x384xf32>
    %49 = vector.shape_cast %48 : vector<2x1x384xf32> to vector<2x384xf32>
    %cst_20 = arith.constant dense<0.000000e+00> : vector<2x384xf32>
    %50 = tpu.matmul %44, %11, %cst_20 {dimension_numbers = #tpu.dot_dimension_numbers<[1], [0], [0], [1], [0, 0, 1, 1], [], []>} : vector<2x128xf32>, vector<128x384xf32>, vector<2x384xf32> -> vector<2x384xf32>
    %51 = vector.extract_strided_slice %49 {offsets = [0, 0], sizes = [2, 128], strides = [1, 1]} : vector<2x384xf32> to vector<2x128xf32>
    %52 = vector.extract_strided_slice %50 {offsets = [0, 0], sizes = [2, 128], strides = [1, 1]} : vector<2x384xf32> to vector<2x128xf32>
    %53 = arith.addf %51, %52 : vector<2x128xf32>
    %54 = arith.negf %53 : vector<2x128xf32>
    %55 = math.exp %54 : vector<2x128xf32>
    %cst_21 = arith.constant 1.000000e+00 : f32
    %56 = vector.broadcast %cst_21 : f32 to vector<2x128xf32>
    %57 = arith.addf %56, %55 : vector<2x128xf32>
    %58 = arith.divf %56, %57 : vector<2x128xf32>
    %59 = vector.extract_strided_slice %49 {offsets = [0, 128], sizes = [2, 128], strides = [1, 1]} : vector<2x384xf32> to vector<2x128xf32>
    %60 = vector.extract_strided_slice %50 {offsets = [0, 128], sizes = [2, 128], strides = [1, 1]} : vector<2x384xf32> to vector<2x128xf32>
    %61 = arith.addf %59, %60 : vector<2x128xf32>
    %62 = arith.negf %61 : vector<2x128xf32>
    %63 = math.exp %62 : vector<2x128xf32>
    %cst_22 = arith.constant 1.000000e+00 : f32
    %64 = vector.broadcast %cst_22 : f32 to vector<2x128xf32>
    %65 = arith.addf %64, %63 : vector<2x128xf32>
    %66 = arith.divf %64, %65 : vector<2x128xf32>
    %67 = vector.extract_strided_slice %49 {offsets = [0, 256], sizes = [2, 128], strides = [1, 1]} : vector<2x384xf32> to vector<2x128xf32>
    %68 = vector.extract_strided_slice %50 {offsets = [0, 256], sizes = [2, 128], strides = [1, 1]} : vector<2x384xf32> to vector<2x128xf32>
    %69 = vector.broadcast %12 : vector<1x128xf32> to vector<2x128xf32>
    %70 = arith.addf %68, %69 : vector<2x128xf32>
    %71 = arith.mulf %58, %70 : vector<2x128xf32>
    %72 = arith.addf %67, %71 : vector<2x128xf32>
    %73 = math.tanh %72 : vector<2x128xf32>
    %cst_23 = arith.constant 1.000000e+00 : f32
    %74 = vector.broadcast %cst_23 : f32 to vector<2x128xf32>
    %75 = arith.subf %74, %66 : vector<2x128xf32>
    %76 = arith.mulf %75, %73 : vector<2x128xf32>
    %77 = arith.mulf %66, %44 : vector<2x128xf32>
    %78 = arith.addf %76, %77 : vector<2x128xf32>
    %c0_24 = arith.constant 0 : index
    %c1 = arith.constant 1 : index
    %c0_25 = arith.constant 0 : index
    %79 = vector.load %arg10[%c0_24, %c1, %c0_25] : memref<2x8x128xf32, #tpu.memory_space<vmem>>, vector<2x1x128xf32>
    %80 = vector.shape_cast %79 : vector<2x1x128xf32> to vector<2x128xf32>
    %81 = vector.shape_cast %78 : vector<2x128xf32> to vector<2x1x128xf32>
    tpu.vector_store %arg10[%c0_24, %c1, %c0_25], %81 {strides = array<i32>} : memref<2x8x128xf32, #tpu.memory_space<vmem>>, vector<2x1x128xf32>,
    %82 = vector.extract_strided_slice %10 {offsets = [0, 2, 0], sizes = [2, 1, 384], strides = [1, 1, 1]} : vector<2x8x384xf32> to vector<2x1x384xf32>
    %83 = vector.shape_cast %82 : vector<2x1x384xf32> to vector<2x384xf32>
    %cst_26 = arith.constant dense<0.000000e+00> : vector<2x384xf32>
    %84 = tpu.matmul %78, %11, %cst_26 {dimension_numbers = #tpu.dot_dimension_numbers<[1], [0], [0], [1], [0, 0, 1, 1], [], []>} : vector<2x128xf32>, vector<128x384xf32>, vector<2x384xf32> -> vector<2x384xf32>
    %85 = vector.extract_strided_slice %83 {offsets = [0, 0], sizes = [2, 128], strides = [1, 1]} : vector<2x384xf32> to vector<2x128xf32>
    %86 = vector.extract_strided_slice %84 {offsets = [0, 0], sizes = [2, 128], strides = [1, 1]} : vector<2x384xf32> to vector<2x128xf32>
    %87 = arith.addf %85, %86 : vector<2x128xf32>
    %88 = arith.negf %87 : vector<2x128xf32>
    %89 = math.exp %88 : vector<2x128xf32>
    %cst_27 = arith.constant 1.000000e+00 : f32
    %90 = vector.broadcast %cst_27 : f32 to vector<2x128xf32>
    %91 = arith.addf %90, %89 : vector<2x128xf32>
    %92 = arith.divf %90, %91 : vector<2x128xf32>
    %93 = vector.extract_strided_slice %83 {offsets = [0, 128], sizes = [2, 128], strides = [1, 1]} : vector<2x384xf32> to vector<2x128xf32>
    %94 = vector.extract_strided_slice %84 {offsets = [0, 128], sizes = [2, 128], strides = [1, 1]} : vector<2x384xf32> to vector<2x128xf32>
    %95 = arith.addf %93, %94 : vector<2x128xf32>
    %96 = arith.negf %95 : vector<2x128xf32>
    %97 = math.exp %96 : vector<2x128xf32>
    %cst_28 = arith.constant 1.000000e+00 : f32
    %98 = vector.broadcast %cst_28 : f32 to vector<2x128xf32>
    %99 = arith.addf %98, %97 : vector<2x128xf32>
    %100 = arith.divf %98, %99 : vector<2x128xf32>
    %101 = vector.extract_strided_slice %83 {offsets = [0, 256], sizes = [2, 128], strides = [1, 1]} : vector<2x384xf32> to vector<2x128xf32>
    %102 = vector.extract_strided_slice %84 {offsets = [0, 256], sizes = [2, 128], strides = [1, 1]} : vector<2x384xf32> to vector<2x128xf32>
    %103 = vector.broadcast %12 : vector<1x128xf32> to vector<2x128xf32>
    %104 = arith.addf %102, %103 : vector<2x128xf32>
    %105 = arith.mulf %92, %104 : vector<2x128xf32>
    %106 = arith.addf %101, %105 : vector<2x128xf32>
    %107 = math.tanh %106 : vector<2x128xf32>
    %cst_29 = arith.constant 1.000000e+00 : f32
    %108 = vector.broadcast %cst_29 : f32 to vector<2x128xf32>
    %109 = arith.subf %108, %100 : vector<2x128xf32>
    %110 = arith.mulf %109, %107 : vector<2x128xf32>
    %111 = arith.mulf %100, %78 : vector<2x128xf32>
    %112 = arith.addf %110, %111 : vector<2x128xf32>
    %c0_30 = arith.constant 0 : index
    %c2 = arith.constant 2 : index
    %c0_31 = arith.constant 0 : index
    %113 = vector.load %arg10[%c0_30, %c2, %c0_31] : memref<2x8x128xf32, #tpu.memory_space<vmem>>, vector<2x1x128xf32>
    %114 = vector.shape_cast %113 : vector<2x1x128xf32> to vector<2x128xf32>
    %115 = vector.shape_cast %112 : vector<2x128xf32> to vector<2x1x128xf32>
    tpu.vector_store %arg10[%c0_30, %c2, %c0_31], %115 {strides = array<i32>} : memref<2x8x128xf32, #tpu.memory_space<vmem>>, vector<2x1x128xf32>,
    %116 = vector.extract_strided_slice %10 {offsets = [0, 3, 0], sizes = [2, 1, 384], strides = [1, 1, 1]} : vector<2x8x384xf32> to vector<2x1x384xf32>
    %117 = vector.shape_cast %116 : vector<2x1x384xf32> to vector<2x384xf32>
    %cst_32 = arith.constant dense<0.000000e+00> : vector<2x384xf32>
    %118 = tpu.matmul %112, %11, %cst_32 {dimension_numbers = #tpu.dot_dimension_numbers<[1], [0], [0], [1], [0, 0, 1, 1], [], []>} : vector<2x128xf32>, vector<128x384xf32>, vector<2x384xf32> -> vector<2x384xf32>
    %119 = vector.extract_strided_slice %117 {offsets = [0, 0], sizes = [2, 128], strides = [1, 1]} : vector<2x384xf32> to vector<2x128xf32>
    %120 = vector.extract_strided_slice %118 {offsets = [0, 0], sizes = [2, 128], strides = [1, 1]} : vector<2x384xf32> to vector<2x128xf32>
    %121 = arith.addf %119, %120 : vector<2x128xf32>
    %122 = arith.negf %121 : vector<2x128xf32>
    %123 = math.exp %122 : vector<2x128xf32>
    %cst_33 = arith.constant 1.000000e+00 : f32
    %124 = vector.broadcast %cst_33 : f32 to vector<2x128xf32>
    %125 = arith.addf %124, %123 : vector<2x128xf32>
    %126 = arith.divf %124, %125 : vector<2x128xf32>
    %127 = vector.extract_strided_slice %117 {offsets = [0, 128], sizes = [2, 128], strides = [1, 1]} : vector<2x384xf32> to vector<2x128xf32>
    %128 = vector.extract_strided_slice %118 {offsets = [0, 128], sizes = [2, 128], strides = [1, 1]} : vector<2x384xf32> to vector<2x128xf32>
    %129 = arith.addf %127, %128 : vector<2x128xf32>
    %130 = arith.negf %129 : vector<2x128xf32>
    %131 = math.exp %130 : vector<2x128xf32>
    %cst_34 = arith.constant 1.000000e+00 : f32
    %132 = vector.broadcast %cst_34 : f32 to vector<2x128xf32>
    %133 = arith.addf %132, %131 : vector<2x128xf32>
    %134 = arith.divf %132, %133 : vector<2x128xf32>
    %135 = vector.extract_strided_slice %117 {offsets = [0, 256], sizes = [2, 128], strides = [1, 1]} : vector<2x384xf32> to vector<2x128xf32>
    %136 = vector.extract_strided_slice %118 {offsets = [0, 256], sizes = [2, 128], strides = [1, 1]} : vector<2x384xf32> to vector<2x128xf32>
    %137 = vector.broadcast %12 : vector<1x128xf32> to vector<2x128xf32>
    %138 = arith.addf %136, %137 : vector<2x128xf32>
    %139 = arith.mulf %126, %138 : vector<2x128xf32>
    %140 = arith.addf %135, %139 : vector<2x128xf32>
    %141 = math.tanh %140 : vector<2x128xf32>
    %cst_35 = arith.constant 1.000000e+00 : f32
    %142 = vector.broadcast %cst_35 : f32 to vector<2x128xf32>
    %143 = arith.subf %142, %134 : vector<2x128xf32>
    %144 = arith.mulf %143, %141 : vector<2x128xf32>
    %145 = arith.mulf %134, %112 : vector<2x128xf32>
    %146 = arith.addf %144, %145 : vector<2x128xf32>
    %c0_36 = arith.constant 0 : index
    %c3 = arith.constant 3 : index
    %c0_37 = arith.constant 0 : index
    %147 = vector.load %arg10[%c0_36, %c3, %c0_37] : memref<2x8x128xf32, #tpu.memory_space<vmem>>, vector<2x1x128xf32>
    %148 = vector.shape_cast %147 : vector<2x1x128xf32> to vector<2x128xf32>
    %149 = vector.shape_cast %146 : vector<2x128xf32> to vector<2x1x128xf32>
    tpu.vector_store %arg10[%c0_36, %c3, %c0_37], %149 {strides = array<i32>} : memref<2x8x128xf32, #tpu.memory_space<vmem>>, vector<2x1x128xf32>,
    %150 = vector.extract_strided_slice %10 {offsets = [0, 4, 0], sizes = [2, 1, 384], strides = [1, 1, 1]} : vector<2x8x384xf32> to vector<2x1x384xf32>
    %151 = vector.shape_cast %150 : vector<2x1x384xf32> to vector<2x384xf32>
    %cst_38 = arith.constant dense<0.000000e+00> : vector<2x384xf32>
    %152 = tpu.matmul %146, %11, %cst_38 {dimension_numbers = #tpu.dot_dimension_numbers<[1], [0], [0], [1], [0, 0, 1, 1], [], []>} : vector<2x128xf32>, vector<128x384xf32>, vector<2x384xf32> -> vector<2x384xf32>
    %153 = vector.extract_strided_slice %151 {offsets = [0, 0], sizes = [2, 128], strides = [1, 1]} : vector<2x384xf32> to vector<2x128xf32>
    %154 = vector.extract_strided_slice %152 {offsets = [0, 0], sizes = [2, 128], strides = [1, 1]} : vector<2x384xf32> to vector<2x128xf32>
    %155 = arith.addf %153, %154 : vector<2x128xf32>
    %156 = arith.negf %155 : vector<2x128xf32>
    %157 = math.exp %156 : vector<2x128xf32>
    %cst_39 = arith.constant 1.000000e+00 : f32
    %158 = vector.broadcast %cst_39 : f32 to vector<2x128xf32>
    %159 = arith.addf %158, %157 : vector<2x128xf32>
    %160 = arith.divf %158, %159 : vector<2x128xf32>
    %161 = vector.extract_strided_slice %151 {offsets = [0, 128], sizes = [2, 128], strides = [1, 1]} : vector<2x384xf32> to vector<2x128xf32>
    %162 = vector.extract_strided_slice %152 {offsets = [0, 128], sizes = [2, 128], strides = [1, 1]} : vector<2x384xf32> to vector<2x128xf32>
    %163 = arith.addf %161, %162 : vector<2x128xf32>
    %164 = arith.negf %163 : vector<2x128xf32>
    %165 = math.exp %164 : vector<2x128xf32>
    %cst_40 = arith.constant 1.000000e+00 : f32
    %166 = vector.broadcast %cst_40 : f32 to vector<2x128xf32>
    %167 = arith.addf %166, %165 : vector<2x128xf32>
    %168 = arith.divf %166, %167 : vector<2x128xf32>
    %169 = vector.extract_strided_slice %151 {offsets = [0, 256], sizes = [2, 128], strides = [1, 1]} : vector<2x384xf32> to vector<2x128xf32>
    %170 = vector.extract_strided_slice %152 {offsets = [0, 256], sizes = [2, 128], strides = [1, 1]} : vector<2x384xf32> to vector<2x128xf32>
    %171 = vector.broadcast %12 : vector<1x128xf32> to vector<2x128xf32>
    %172 = arith.addf %170, %171 : vector<2x128xf32>
    %173 = arith.mulf %160, %172 : vector<2x128xf32>
    %174 = arith.addf %169, %173 : vector<2x128xf32>
    %175 = math.tanh %174 : vector<2x128xf32>
    %cst_41 = arith.constant 1.000000e+00 : f32
    %176 = vector.broadcast %cst_41 : f32 to vector<2x128xf32>
    %177 = arith.subf %176, %168 : vector<2x128xf32>
    %178 = arith.mulf %177, %175 : vector<2x128xf32>
    %179 = arith.mulf %168, %146 : vector<2x128xf32>
    %180 = arith.addf %178, %179 : vector<2x128xf32>
    %c0_42 = arith.constant 0 : index
    %c4 = arith.constant 4 : index
    %c0_43 = arith.constant 0 : index
    %181 = vector.load %arg10[%c0_42, %c4, %c0_43] : memref<2x8x128xf32, #tpu.memory_space<vmem>>, vector<2x1x128xf32>
    %182 = vector.shape_cast %181 : vector<2x1x128xf32> to vector<2x128xf32>
    %183 = vector.shape_cast %180 : vector<2x128xf32> to vector<2x1x128xf32>
    tpu.vector_store %arg10[%c0_42, %c4, %c0_43], %183 {strides = array<i32>} : memref<2x8x128xf32, #tpu.memory_space<vmem>>, vector<2x1x128xf32>,
    %184 = vector.extract_strided_slice %10 {offsets = [0, 5, 0], sizes = [2, 1, 384], strides = [1, 1, 1]} : vector<2x8x384xf32> to vector<2x1x384xf32>
    %185 = vector.shape_cast %184 : vector<2x1x384xf32> to vector<2x384xf32>
    %cst_44 = arith.constant dense<0.000000e+00> : vector<2x384xf32>
    %186 = tpu.matmul %180, %11, %cst_44 {dimension_numbers = #tpu.dot_dimension_numbers<[1], [0], [0], [1], [0, 0, 1, 1], [], []>} : vector<2x128xf32>, vector<128x384xf32>, vector<2x384xf32> -> vector<2x384xf32>
    %187 = vector.extract_strided_slice %185 {offsets = [0, 0], sizes = [2, 128], strides = [1, 1]} : vector<2x384xf32> to vector<2x128xf32>
    %188 = vector.extract_strided_slice %186 {offsets = [0, 0], sizes = [2, 128], strides = [1, 1]} : vector<2x384xf32> to vector<2x128xf32>
    %189 = arith.addf %187, %188 : vector<2x128xf32>
    %190 = arith.negf %189 : vector<2x128xf32>
    %191 = math.exp %190 : vector<2x128xf32>
    %cst_45 = arith.constant 1.000000e+00 : f32
    %192 = vector.broadcast %cst_45 : f32 to vector<2x128xf32>
    %193 = arith.addf %192, %191 : vector<2x128xf32>
    %194 = arith.divf %192, %193 : vector<2x128xf32>
    %195 = vector.extract_strided_slice %185 {offsets = [0, 128], sizes = [2, 128], strides = [1, 1]} : vector<2x384xf32> to vector<2x128xf32>
    %196 = vector.extract_strided_slice %186 {offsets = [0, 128], sizes = [2, 128], strides = [1, 1]} : vector<2x384xf32> to vector<2x128xf32>
    %197 = arith.addf %195, %196 : vector<2x128xf32>
    %198 = arith.negf %197 : vector<2x128xf32>
    %199 = math.exp %198 : vector<2x128xf32>
    %cst_46 = arith.constant 1.000000e+00 : f32
    %200 = vector.broadcast %cst_46 : f32 to vector<2x128xf32>
    %201 = arith.addf %200, %199 : vector<2x128xf32>
    %202 = arith.divf %200, %201 : vector<2x128xf32>
    %203 = vector.extract_strided_slice %185 {offsets = [0, 256], sizes = [2, 128], strides = [1, 1]} : vector<2x384xf32> to vector<2x128xf32>
    %204 = vector.extract_strided_slice %186 {offsets = [0, 256], sizes = [2, 128], strides = [1, 1]} : vector<2x384xf32> to vector<2x128xf32>
    %205 = vector.broadcast %12 : vector<1x128xf32> to vector<2x128xf32>
    %206 = arith.addf %204, %205 : vector<2x128xf32>
    %207 = arith.mulf %194, %206 : vector<2x128xf32>
    %208 = arith.addf %203, %207 : vector<2x128xf32>
    %209 = math.tanh %208 : vector<2x128xf32>
    %cst_47 = arith.constant 1.000000e+00 : f32
    %210 = vector.broadcast %cst_47 : f32 to vector<2x128xf32>
    %211 = arith.subf %210, %202 : vector<2x128xf32>
    %212 = arith.mulf %211, %209 : vector<2x128xf32>
    %213 = arith.mulf %202, %180 : vector<2x128xf32>
    %214 = arith.addf %212, %213 : vector<2x128xf32>
    %c0_48 = arith.constant 0 : index
    %c5 = arith.constant 5 : index
    %c0_49 = arith.constant 0 : index
    %215 = vector.load %arg10[%c0_48, %c5, %c0_49] : memref<2x8x128xf32, #tpu.memory_space<vmem>>, vector<2x1x128xf32>
    %216 = vector.shape_cast %215 : vector<2x1x128xf32> to vector<2x128xf32>
    %217 = vector.shape_cast %214 : vector<2x128xf32> to vector<2x1x128xf32>
    tpu.vector_store %arg10[%c0_48, %c5, %c0_49], %217 {strides = array<i32>} : memref<2x8x128xf32, #tpu.memory_space<vmem>>, vector<2x1x128xf32>,
    %218 = vector.extract_strided_slice %10 {offsets = [0, 6, 0], sizes = [2, 1, 384], strides = [1, 1, 1]} : vector<2x8x384xf32> to vector<2x1x384xf32>
    %219 = vector.shape_cast %218 : vector<2x1x384xf32> to vector<2x384xf32>
    %cst_50 = arith.constant dense<0.000000e+00> : vector<2x384xf32>
    %220 = tpu.matmul %214, %11, %cst_50 {dimension_numbers = #tpu.dot_dimension_numbers<[1], [0], [0], [1], [0, 0, 1, 1], [], []>} : vector<2x128xf32>, vector<128x384xf32>, vector<2x384xf32> -> vector<2x384xf32>
    %221 = vector.extract_strided_slice %219 {offsets = [0, 0], sizes = [2, 128], strides = [1, 1]} : vector<2x384xf32> to vector<2x128xf32>
    %222 = vector.extract_strided_slice %220 {offsets = [0, 0], sizes = [2, 128], strides = [1, 1]} : vector<2x384xf32> to vector<2x128xf32>
    %223 = arith.addf %221, %222 : vector<2x128xf32>
    %224 = arith.negf %223 : vector<2x128xf32>
    %225 = math.exp %224 : vector<2x128xf32>
    %cst_51 = arith.constant 1.000000e+00 : f32
    %226 = vector.broadcast %cst_51 : f32 to vector<2x128xf32>
    %227 = arith.addf %226, %225 : vector<2x128xf32>
    %228 = arith.divf %226, %227 : vector<2x128xf32>
    %229 = vector.extract_strided_slice %219 {offsets = [0, 128], sizes = [2, 128], strides = [1, 1]} : vector<2x384xf32> to vector<2x128xf32>
    %230 = vector.extract_strided_slice %220 {offsets = [0, 128], sizes = [2, 128], strides = [1, 1]} : vector<2x384xf32> to vector<2x128xf32>
    %231 = arith.addf %229, %230 : vector<2x128xf32>
    %232 = arith.negf %231 : vector<2x128xf32>
    %233 = math.exp %232 : vector<2x128xf32>
    %cst_52 = arith.constant 1.000000e+00 : f32
    %234 = vector.broadcast %cst_52 : f32 to vector<2x128xf32>
    %235 = arith.addf %234, %233 : vector<2x128xf32>
    %236 = arith.divf %234, %235 : vector<2x128xf32>
    %237 = vector.extract_strided_slice %219 {offsets = [0, 256], sizes = [2, 128], strides = [1, 1]} : vector<2x384xf32> to vector<2x128xf32>
    %238 = vector.extract_strided_slice %220 {offsets = [0, 256], sizes = [2, 128], strides = [1, 1]} : vector<2x384xf32> to vector<2x128xf32>
    %239 = vector.broadcast %12 : vector<1x128xf32> to vector<2x128xf32>
    %240 = arith.addf %238, %239 : vector<2x128xf32>
    %241 = arith.mulf %228, %240 : vector<2x128xf32>
    %242 = arith.addf %237, %241 : vector<2x128xf32>
    %243 = math.tanh %242 : vector<2x128xf32>
    %cst_53 = arith.constant 1.000000e+00 : f32
    %244 = vector.broadcast %cst_53 : f32 to vector<2x128xf32>
    %245 = arith.subf %244, %236 : vector<2x128xf32>
    %246 = arith.mulf %245, %243 : vector<2x128xf32>
    %247 = arith.mulf %236, %214 : vector<2x128xf32>
    %248 = arith.addf %246, %247 : vector<2x128xf32>
    %c0_54 = arith.constant 0 : index
    %c6 = arith.constant 6 : index
    %c0_55 = arith.constant 0 : index
    %249 = vector.load %arg10[%c0_54, %c6, %c0_55] : memref<2x8x128xf32, #tpu.memory_space<vmem>>, vector<2x1x128xf32>
    %250 = vector.shape_cast %249 : vector<2x1x128xf32> to vector<2x128xf32>
    %251 = vector.shape_cast %248 : vector<2x128xf32> to vector<2x1x128xf32>
    tpu.vector_store %arg10[%c0_54, %c6, %c0_55], %251 {strides = array<i32>} : memref<2x8x128xf32, #tpu.memory_space<vmem>>, vector<2x1x128xf32>,
    %252 = vector.extract_strided_slice %10 {offsets = [0, 7, 0], sizes = [2, 1, 384], strides = [1, 1, 1]} : vector<2x8x384xf32> to vector<2x1x384xf32>
    %253 = vector.shape_cast %252 : vector<2x1x384xf32> to vector<2x384xf32>
    %cst_56 = arith.constant dense<0.000000e+00> : vector<2x384xf32>
    %254 = tpu.matmul %248, %11, %cst_56 {dimension_numbers = #tpu.dot_dimension_numbers<[1], [0], [0], [1], [0, 0, 1, 1], [], []>} : vector<2x128xf32>, vector<128x384xf32>, vector<2x384xf32> -> vector<2x384xf32>
    %255 = vector.extract_strided_slice %253 {offsets = [0, 0], sizes = [2, 128], strides = [1, 1]} : vector<2x384xf32> to vector<2x128xf32>
    %256 = vector.extract_strided_slice %254 {offsets = [0, 0], sizes = [2, 128], strides = [1, 1]} : vector<2x384xf32> to vector<2x128xf32>
    %257 = arith.addf %255, %256 : vector<2x128xf32>
    %258 = arith.negf %257 : vector<2x128xf32>
    %259 = math.exp %258 : vector<2x128xf32>
    %cst_57 = arith.constant 1.000000e+00 : f32
    %260 = vector.broadcast %cst_57 : f32 to vector<2x128xf32>
    %261 = arith.addf %260, %259 : vector<2x128xf32>
    %262 = arith.divf %260, %261 : vector<2x128xf32>
    %263 = vector.extract_strided_slice %253 {offsets = [0, 128], sizes = [2, 128], strides = [1, 1]} : vector<2x384xf32> to vector<2x128xf32>
    %264 = vector.extract_strided_slice %254 {offsets = [0, 128], sizes = [2, 128], strides = [1, 1]} : vector<2x384xf32> to vector<2x128xf32>
    %265 = arith.addf %263, %264 : vector<2x128xf32>
    %266 = arith.negf %265 : vector<2x128xf32>
    %267 = math.exp %266 : vector<2x128xf32>
    %cst_58 = arith.constant 1.000000e+00 : f32
    %268 = vector.broadcast %cst_58 : f32 to vector<2x128xf32>
    %269 = arith.addf %268, %267 : vector<2x128xf32>
    %270 = arith.divf %268, %269 : vector<2x128xf32>
    %271 = vector.extract_strided_slice %253 {offsets = [0, 256], sizes = [2, 128], strides = [1, 1]} : vector<2x384xf32> to vector<2x128xf32>
    %272 = vector.extract_strided_slice %254 {offsets = [0, 256], sizes = [2, 128], strides = [1, 1]} : vector<2x384xf32> to vector<2x128xf32>
    %273 = vector.broadcast %12 : vector<1x128xf32> to vector<2x128xf32>
    %274 = arith.addf %272, %273 : vector<2x128xf32>
    %275 = arith.mulf %262, %274 : vector<2x128xf32>
    %276 = arith.addf %271, %275 : vector<2x128xf32>
    %277 = math.tanh %276 : vector<2x128xf32>
    %cst_59 = arith.constant 1.000000e+00 : f32
    %278 = vector.broadcast %cst_59 : f32 to vector<2x128xf32>
    %279 = arith.subf %278, %270 : vector<2x128xf32>
    %280 = arith.mulf %279, %277 : vector<2x128xf32>
    %281 = arith.mulf %270, %248 : vector<2x128xf32>
    %282 = arith.addf %280, %281 : vector<2x128xf32>
    %c0_60 = arith.constant 0 : index
    %c7 = arith.constant 7 : index
    %c0_61 = arith.constant 0 : index
    %283 = vector.load %arg10[%c0_60, %c7, %c0_61] : memref<2x8x128xf32, #tpu.memory_space<vmem>>, vector<2x1x128xf32>
    %284 = vector.shape_cast %283 : vector<2x1x128xf32> to vector<2x128xf32>
    %285 = vector.shape_cast %282 : vector<2x128xf32> to vector<2x1x128xf32>
    tpu.vector_store %arg10[%c0_60, %c7, %c0_61], %285 {strides = array<i32>} : memref<2x8x128xf32, #tpu.memory_space<vmem>>, vector<2x1x128xf32>,
    %c0_62 = arith.constant 0 : index
    %c0_63 = arith.constant 0 : index
    %286 = vector.load %arg9[%c0_62, %c0_63] : memref<2x128xf32, #tpu.memory_space<vmem>>, vector<2x128xf32>
    tpu.vector_store %arg9[%c0_62, %c0_63], %282 {strides = array<i32>} : memref<2x128xf32, #tpu.memory_space<vmem>>, vector<2x128xf32>,
    %c0_64 = arith.constant 0 : index
    %c0_65 = arith.constant 0 : index
    %c0_66 = arith.constant 0 : index
    %287 = vector.load %arg10[%c0_64, %c0_65, %c0_66] : memref<2x8x128xf32, #tpu.memory_space<vmem>>, vector<2x8x128xf32>
    %288 = vector.shape_cast %287 : vector<2x8x128xf32> to vector<16x128xf32>
    %c0_67 = arith.constant 0 : index
    %c0_68 = arith.constant 0 : index
    %289 = vector.load %arg6[%c0_67, %c0_68] : memref<128x16xf32, #tpu.memory_space<vmem>>, vector<128x16xf32>
    %cst_69 = arith.constant dense<0.000000e+00> : vector<16x16xf32>
    %290 = tpu.matmul %288, %289, %cst_69 {dimension_numbers = #tpu.dot_dimension_numbers<[1], [0], [0], [1], [0, 0, 1, 1], [], []>} : vector<16x128xf32>, vector<128x16xf32>, vector<16x16xf32> -> vector<16x16xf32>
    %c0_70 = arith.constant 0 : index
    %c0_71 = arith.constant 0 : index
    %291 = vector.load %arg7[%c0_70, %c0_71] : memref<1x16xf32, #tpu.memory_space<vmem>>, vector<1x16xf32>
    %292 = vector.broadcast %291 : vector<1x16xf32> to vector<16x16xf32>
    %293 = arith.addf %290, %292 : vector<16x16xf32>
    %cst_72 = arith.constant 0.000000e+00 : f32
    %294 = vector.broadcast %cst_72 : f32 to vector<16x16xf32>
    %295 = arith.cmpf ogt, %293, %294 : vector<16x16xf32>
    %cst_73 = arith.constant 0.00999999977 : f32
    %296 = vector.broadcast %cst_73 : f32 to vector<16x16xf32>
    %297 = arith.mulf %296, %293 : vector<16x16xf32>
    %298 = arith.select %295, %293, %297 : vector<16x16xi1>, vector<16x16xf32>
    %299 = vector.shape_cast %298 : vector<16x16xf32> to vector<2x8x16xf32>
    %c0_74 = arith.constant 0 : index
    %c0_75 = arith.constant 0 : index
    %c0_76 = arith.constant 0 : index
    %300 = vector.load %arg8[%c0_74, %c0_75, %c0_76] : memref<2x8x16xf32, #tpu.memory_space<vmem>>, vector<2x8x16xf32>
    tpu.vector_store %arg8[%c0_74, %c0_75, %c0_76], %299 {strides = array<i32>} : memref<2x8x16xf32, #tpu.memory_space<vmem>>, vector<2x8x16xf32>,
    return
  }
  func.func @transform_0(%arg0: i32) -> (i32, i32, i32) {
    %c0_i32 = arith.constant 0 : i32
    %c0_i32_0 = arith.constant 0 : i32
    %c0_i32_1 = arith.constant 0 : i32
    return %c0_i32, %arg0, %c0_i32_0 : i32, i32, i32
  }
  func.func @transform_1(%arg0: i32) -> (i32, i32) {
    %c0_i32 = arith.constant 0 : i32
    %c0_i32_0 = arith.constant 0 : i32
    %c0_i32_1 = arith.constant 0 : i32
    return %c0_i32, %c0_i32_0 : i32, i32
  }
  func.func @transform_2(%arg0: i32) -> (i32, i32) {
    %c0_i32 = arith.constant 0 : i32
    %c0_i32_0 = arith.constant 0 : i32
    %c0_i32_1 = arith.constant 0 : i32
    return %c0_i32, %c0_i32_0 : i32, i32
  }
  func.func @transform_3(%arg0: i32) -> (i32, i32) {
    %c0_i32 = arith.constant 0 : i32
    %c0_i32_0 = arith.constant 0 : i32
    %c0_i32_1 = arith.constant 0 : i32
    return %c0_i32, %c0_i32_0 : i32, i32
  }
  func.func @transform_4(%arg0: i32) -> (i32, i32) {
    %c0_i32 = arith.constant 0 : i32
    %c0_i32_0 = arith.constant 0 : i32
    %c0_i32_1 = arith.constant 0 : i32
    return %c0_i32, %c0_i32_0 : i32, i32
  }
  func.func @transform_5(%arg0: i32) -> (i32, i32) {
    %c0_i32 = arith.constant 0 : i32
    %c0_i32_0 = arith.constant 0 : i32
    %c0_i32_1 = arith.constant 0 : i32
    return %c0_i32, %c0_i32_0 : i32, i32
  }
  func.func @transform_6(%arg0: i32) -> (i32, i32) {
    %c0_i32 = arith.constant 0 : i32
    %c0_i32_0 = arith.constant 0 : i32
    %c0_i32_1 = arith.constant 0 : i32
    return %c0_i32, %c0_i32_0 : i32, i32
  }
  func.func @transform_7(%arg0: i32) -> (i32, i32, i32) {
    %c0_i32 = arith.constant 0 : i32
    %c0_i32_0 = arith.constant 0 : i32
    %c0_i32_1 = arith.constant 0 : i32
    return %c0_i32, %arg0, %c0_i32_0 : i32, i32, i32
  }
}

</mosaic_0001>

<llo_original>
// kernel: tpu_custom_call.1
$region0: #{tpu_custom_call.1}
  #allocation0 [shape = 'u32[]', space=smem, size = 0x4, offset = 0x4, fixed_abs, tag = 'smem constant byte address 0x4 - core index']
  #allocation1 [shape = 'u32[144,128]{1,0:T(1,128)}', space=vmem, size = 0x12000, scoped, tag = 'internal scratch']
  #allocation2 [shape = 'f32[2,128]{1,0:T(2,128)}', space=vmem, size = 0x400, scoped, tag = 'scratch operand']
  #allocation3 [shape = 'f32[2,8,128]{2,1,0:T(8,128)}', space=vmem, size = 0x2000, scoped, tag = 'scratch operand']
  %s0 = inlined_call_operand.vmem [shape: f32[2,8,32], index: 0, kind: input, shape index: {}]
  %s1 = inlined_call_operand.vmem [shape: f32[32,384], index: 1, kind: input, shape index: {}]
  %s2 = inlined_call_operand.hbm [shape: f32[128,384], index: 2, kind: input, shape index: {}]
  %s3 = inlined_call_operand.vmem [shape: f32[1,384], index: 3, kind: input, shape index: {}]
  %s4 = inlined_call_operand.vmem [shape: f32[1,128], index: 4, kind: input, shape index: {}]
  %s5 = inlined_call_operand.vmem [shape: f32[128,16], index: 5, kind: input, shape index: {}]
  %s6 = inlined_call_operand.vmem [shape: f32[1,16], index: 6, kind: input, shape index: {}]
  %s7 = inlined_call_operand.hbm [shape: f32[2,8,16], index: 7, kind: output, shape index: {}]
  %s8 = sld [smem:[#allocation0]]
  $region46: #{tpu_custom_call.1} parent=0
    _
  %s10 = ssub.s32 1, %s8
  %s11 = scalar_select 0, %s10, %s8
  $region1: #{tpu_custom_call.1} parent=0
    #allocation4 [shape = 'u8[196608]{0}', space=vmem, size = 0x30000, scoped, tag = 'input window, operand 2, single buffered']
    #allocation5 [shape = 's32[1]{0}', space=sflag, size = 0x4, scoped, tag = 'scoped memory for tpu_custom_call.1']
    #allocation6 [shape = 's32[1]{0}', space=sflag, size = 0x4, scoped, tag = 'scoped memory for tpu_custom_call.1']
    #allocation7 [shape = 'u8[8192]{0}', space=vmem, size = 0x2000, scoped, tag = 'output window, operand 0, single buffered']
    %12 = vsyncpa [#allocation5], 0
    %13 = vsyncpa [#allocation6], 0
    // Predicated region
    $region2: #{tpu_custom_call.1} parent=1 // pred_check
      _
    $region3: #{tpu_custom_call.1} parent=1 // pred_check_branch
      %15 = sbr.rel (0) target = $region5
    $region4: #{tpu_custom_call.1} parent=1 // pred_region
      _
    $region5: #{tpu_custom_call.1} parent=1 // pred_fallthru
      _
    // Predicated region
    $region6: #{tpu_custom_call.1} parent=1 // pred_check
      _
    $region7: #{tpu_custom_call.1} parent=1 // pred_check_branch
      %17 = sbr.rel (0) target = $region9
    $region8: #{tpu_custom_call.1} parent=1 // pred_region
      _
    $region9: #{tpu_custom_call.1} parent=1 // pred_fallthru
      _
    // Predicated region
    $region10: #{tpu_custom_call.1} parent=1 // pred_check
      _
    $region11: #{tpu_custom_call.1} parent=1 // pred_check_branch
      %19 = sbr.rel (0) target = $region13
    $region12: #{tpu_custom_call.1} parent=1 // pred_region
      %s21 = ssub.s32 6144, 6144
      %22 = vsyncadd [#allocation5], %s21
      %s23 = sshll.u32 [#allocation4], 4
      %s24 = int_to_ptr.vmem [resolvable:$true] %s23
      %29 = dma.hbm_to_vmem [thread:$0]  %s2, 6144, %s24, [#allocation5], 384, 384, 24
    $region13: #{tpu_custom_call.1} parent=1 // pred_fallthru
      _
    // Predicated region
    $region14: #{tpu_custom_call.1} parent=1 // pred_check
      _
    $region15: #{tpu_custom_call.1} parent=1 // pred_check_branch
      %31 = sbr.rel (0) target = $region17
    $region16: #{tpu_custom_call.1} parent=1 // pred_region
      _
    $region17: #{tpu_custom_call.1} parent=1 // pred_fallthru
      _
    // Predicated region
    $region18: #{tpu_custom_call.1} parent=1 // pred_check
      _
    $region19: #{tpu_custom_call.1} parent=1 // pred_check_branch
      %33 = sbr.rel (0) target = $region21
    $region20: #{tpu_custom_call.1} parent=1 // pred_region
      _
    $region21: #{tpu_custom_call.1} parent=1 // pred_fallthru
      _
    // Predicated region
    $region22: #{tpu_custom_call.1} parent=1 // pred_check
      _
    $region23: #{tpu_custom_call.1} parent=1 // pred_check_branch
      %35 = sbr.rel (0) target = $region25
    $region24: #{tpu_custom_call.1} parent=1 // pred_region
      _
    $region25: #{tpu_custom_call.1} parent=1 // pred_fallthru
      _
    // Predicated region
    $region26: #{tpu_custom_call.1} parent=1 // pred_check
      _
    $region27: #{tpu_custom_call.1} parent=1 // pred_check_branch
      %37 = sbr.rel (0) target = $region29
    $region28: #{tpu_custom_call.1} parent=1 // pred_region
      _
    $region29: #{tpu_custom_call.1} parent=1 // pred_fallthru
      _
    // Predicated region
    $region30: #{tpu_custom_call.1} parent=1 // pred_check
      _
    $region31: #{tpu_custom_call.1} parent=1 // pred_check_branch
      %39 = sbr.rel (0) target = $region33
    $region32: #{tpu_custom_call.1} parent=1 // pred_region
      %40 = dma.done [#allocation5], 6144
    $region33: #{tpu_custom_call.1} parent=1 // pred_fallthru
      _
    %p41 = scmp.eq.s32.totalorder 0, 0
    // Predicated region
    $region34: #{tpu_custom_call.1} parent=1 // pred_check
      %p42 = pneg %p41
    $region35: #{tpu_custom_call.1} parent=1 // pred_check_branch
      %44 = sbr.rel (%p42) target = $region37
    $region36: #{tpu_custom_call.1} parent=1 // pred_region
      %45 = vst [vmem:[#allocation2] sm:$0x3] 0.0
    $region37: #{tpu_custom_call.1} parent=1 // pred_fallthru
      _
    %v46 = vld [vmem:[%s0] sm:$0xff]
    %v47 = vld [vmem:[%s0 + $0x8] sm:$0xff]
    %v48 = vld [vmem:[%s1] sm:$0xff]
    %v49 = vld [vmem:[%s1 + $0x8] sm:$0xff]
    %v50 = vld [vmem:[%s1 + $0x10] sm:$0xff]
    %v51 = vld [vmem:[%s1 + $0x18] sm:$0xff]
    %v52 = vld [vmem:[%s1 + $0x20] sm:$0xff]
    %v53 = vld [vmem:[%s1 + $0x28] sm:$0xff]
    %v54 = vld [vmem:[%s1 + $0x30] sm:$0xff]
    %v55 = vld [vmem:[%s1 + $0x38] sm:$0xff]
    %v56 = vld [vmem:[%s1 + $0x40] sm:$0xff]
    %v57 = vld [vmem:[%s1 + $0x48] sm:$0xff]
    %v58 = vld [vmem:[%s1 + $0x50] sm:$0xff]
    %v59 = vld [vmem:[%s1 + $0x58] sm:$0xff]
    %v60 = vld [vmem:[%s3] sm:$0x7]
    %v62 = vlaneseq
    %v63 = vshrl.u32 %v62, 7
    %v64 = vsub.s32 0, %v63
    %v65 = vrot.slane %v60, %v64
    %v66 = vlaneseq
    %v67 = vshrl.u32 %v66, 7
    %v68 = vsub.s32 1, %v67
    %v69 = vrot.slane %v60, %v68
    %v70 = vlaneseq
    %v71 = vshrl.u32 %v70, 7
    %v72 = vsub.s32 2, %v71
    %v73 = vrot.slane %v60, %v72
    %vm77 = vcmask 261120
    %v79 = vsel %vm77, %v46, 0
    %v82 = vsel %vm77, %v47, 0
    %84 = vmatprep.subr.mxu0 %v49
    %85 = vmatpush1.msra.mxu0 %v48
    %86 = vmatprep.subr.mxu0 %v52
    %87 = vmatpush1.msra.mxu0 %v51
    %88 = vmatprep.subr.mxu0 %v55
    %89 = vmatpush1.msra.mxu0 %v54
    %90 = vmatprep.subr.mxu0 %v58
    %91 = vmatpush1.msra.mxu0 %v57
    %92 = vmatprep.subr.mxu0 0.0
    %93 = vmatpush1.msra.mxu0 0.0
    %94 = vmatprep.subr.mxu0 0.0
    %95 = vmatpush1.msra.mxu0 0.0
    %96 = vmatprep.subr.mxu0 0.0
    %97 = vmatpush1.msra.mxu0 0.0
    %98 = vmatprep.subr.mxu0 0.0
    %99 = vmatpush1.msra.mxu0 0.0
    %100 = vmatprep.subr.mxu0 0.0
    %101 = vmatpush1.msra.mxu0 0.0
    %102 = vmatprep.subr.mxu0 0.0
    %103 = vmatpush1.msra.mxu0 0.0
    %104 = vmatprep.subr.mxu0 0.0
    %105 = vmatpush1.msra.mxu0 0.0
    %106 = vmatprep.subr.mxu0 0.0
    %107 = vmatpush1.msra.mxu0 0.0
    %108 = vmatprep.subr.mxu0 0.0
    %109 = vmatpush1.msra.mxu0 0.0
    %110 = vmatprep.subr.mxu0 0.0
    %111 = vmatpush1.msra.mxu0 0.0
    %112 = vmatprep.subr.mxu0 0.0
    %113 = vmatpush1.msra.mxu0 0.0
    %114 = vmatprep.subr.mxu0 0.0
    %115 = vmatpush1.msra.mxu0 0.0
    %116 = vmatprep.subr.mxu0 0.0
    %117 = vmatpush1.msra.mxu0 0.0
    %118 = vmatprep.subr.mxu0 0.0
    %119 = vmatpush1.msra.mxu0 0.0
    %120 = vmatprep.subr.mxu0 0.0
    %121 = vmatpush1.msra.mxu0 0.0
    %122 = vmatprep.subr.mxu0 0.0
    %123 = vmatpush1.msra.mxu0 0.0
    %124 = vmatprep.subr.mxu0 0.0
    %125 = vmatpush1.msra.mxu0 0.0
    %126 = vmatprep.subr.mxu0 0.0
    %127 = vmatpush1.msra.mxu0 0.0
    %128 = vmatprep.subr.mxu0 0.0
    %129 = vmatpush1.msra.mxu0 0.0
    %130 = vmatprep.subr.mxu0 0.0
    %131 = vmatpush1.msra.mxu0 0.0
    %132 = vmatprep.subr.mxu0 0.0
    %133 = vmatpush1.msra.mxu0 0.0
    %134 = vmatprep.subr.mxu0 0.0
    %135 = vmatpush1.msra.mxu0 0.0
    %136 = vmatprep.subr.mxu0 0.0
    %137 = vmatpush1.msra.mxu0 0.0
    %138 = vmatprep.subr.mxu0 0.0
    %139 = vmatpush1.msra.mxu0 0.0
    %140 = vmatprep.subr.mxu0 0.0
    %141 = vmatpush1.msra.mxu0 0.0
    %142 = vmatprep.subr.mxu0 0.0
    %143 = vmatpush1.msra.mxu0 0.0
    %144 = vmatprep.subr.mxu0 0.0
    %145 = vmatpush1.msra.mxu0 0.0
    %146 = vmatprep.subr.mxu0 0.0
    %147 = vmatpush1.msra.mxu0 0.0
    %148 = vmatprep.mubr.f32.mxu0 0.0
    %149 = vmatmul.mubr.f32.gmra.mrb[0].mxu0 %v79
    %v150 = vpop.f32.mrb[0].mxu0
    %v151 = vadd.f32 %v65, %v150
    %v152 = vpop.f32.mrb[0].mxu0
    %v153 = vadd.f32 %v69, %v152
    %154 = vmatprep.mubr.f32.mxu0 0.0
    %155 = vmatmul.mubr.f32.gmra.mrb[0].mxu0 %v82
    %v156 = vpop.f32.mrb[0].mxu0
    %v157 = vadd.f32 %v65, %v156
    %v158 = vpop.f32.mrb[0].mxu0
    %v159 = vadd.f32 %v69, %v158
    %160 = vdwg.mxu0
    %161 = vmatprep.subr.mxu0 0.0
    %162 = vmatpush1.msra.mxu0 %v50
    %163 = vmatprep.subr.mxu0 0.0
    %164 = vmatpush1.msra.mxu0 %v53
    %165 = vmatprep.subr.mxu0 0.0
    %166 = vmatpush1.msra.mxu0 %v56
    %167 = vmatprep.subr.mxu0 0.0
    %168 = vmatpush1.msra.mxu0 %v59
    %169 = vmatprep.subr.mxu0 0.0
    %170 = vmatpush1.msra.mxu0 0.0
    %171 = vmatprep.subr.mxu0 0.0
    %172 = vmatpush1.msra.mxu0 0.0
    %173 = vmatprep.subr.mxu0 0.0
    %174 = vmatpush1.msra.mxu0 0.0
    %175 = vmatprep.subr.mxu0 0.0
    %176 = vmatpush1.msra.mxu0 0.0
    %177 = vmatprep.subr.mxu0 0.0
    %178 = vmatpush1.msra.mxu0 0.0
    %179 = vmatprep.subr.mxu0 0.0
    %180 = vmatpush1.msra.mxu0 0.0
    %181 = vmatprep.subr.mxu0 0.0
    %182 = vmatpush1.msra.mxu0 0.0
    %183 = vmatprep.subr.mxu0 0.0
    %184 = vmatpush1.msra.mxu0 0.0
    %185 = vmatprep.subr.mxu0 0.0
    %186 = vmatpush1.msra.mxu0 0.0
    %187 = vmatprep.subr.mxu0 0.0
    %188 = vmatpush1.msra.mxu0 0.0
    %189 = vmatprep.subr.mxu0 0.0
    %190 = vmatpush1.msra.mxu0 0.0
    %191 = vmatprep.subr.mxu0 0.0
    %192 = vmatpush1.msra.mxu0 0.0
    %193 = vmatprep.subr.mxu0 0.0
    %194 = vmatpush1.msra.mxu0 0.0
    %195 = vmatprep.subr.mxu0 0.0
    %196 = vmatpush1.msra.mxu0 0.0
    %197 = vmatprep.subr.mxu0 0.0
    %198 = vmatpush1.msra.mxu0 0.0
    %199 = vmatprep.subr.mxu0 0.0
    %200 = vmatpush1.msra.mxu0 0.0
    %201 = vmatprep.subr.mxu0 0.0
    %202 = vmatpush1.msra.mxu0 0.0
    %203 = vmatprep.subr.mxu0 0.0
    %204 = vmatpush1.msra.mxu0 0.0
    %205 = vmatprep.subr.mxu0 0.0
    %206 = vmatpush1.msra.mxu0 0.0
    %207 = vmatprep.subr.mxu0 0.0
    %208 = vmatpush1.msra.mxu0 0.0
    %209 = vmatprep.subr.mxu0 0.0
    %210 = vmatpush1.msra.mxu0 0.0
    %211 = vmatprep.subr.mxu0 0.0
    %212 = vmatpush1.msra.mxu0 0.0
    %213 = vmatprep.subr.mxu0 0.0
    %214 = vmatpush1.msra.mxu0 0.0
    %215 = vmatprep.subr.mxu0 0.0
    %216 = vmatpush1.msra.mxu0 0.0
    %217 = vmatprep.subr.mxu0 0.0
    %218 = vmatpush1.msra.mxu0 0.0
    %219 = vmatprep.subr.mxu0 0.0
    %220 = vmatpush1.msra.mxu0 0.0
    %221 = vmatprep.subr.mxu0 0.0
    %222 = vmatpush1.msra.mxu0 0.0
    %223 = vmatprep.subr.mxu0 0.0
    %224 = vmatpush1.msra.mxu0 0.0
    %225 = vmatprep.mubr.f32.mxu0 0.0
    %226 = vmatmul.mubr.f32.gmra.mrb[0].mxu0 %v79
    %v227 = vpop.f32.mrb[0].mxu0
    %v228 = vadd.f32 %v73, %v227
    %v229 = vpop.f32.mrb[0].mxu0
    %230 = vmatprep.mubr.f32.mxu0 0.0
    %231 = vmatmul.mubr.f32.gmra.mrb[0].mxu0 %v82
    %v232 = vpop.f32.mrb[0].mxu0
    %v233 = vadd.f32 %v73, %v232
    %v234 = vpop.f32.mrb[0].mxu0
    %235 = vdwg.mxu0
    %v236 = vld [vmem:[#allocation4] sm:$0xff]
    %v237 = vld [vmem:[#allocation4 + $0x8] sm:$0xff]
    %v238 = vld [vmem:[#allocation4 + $0x10] sm:$0xff]
    %v239 = vld [vmem:[#allocation4 + $0x18] sm:$0xff]
    %v240 = vld [vmem:[#allocation4 + $0x20] sm:$0xff]
    %v241 = vld [vmem:[#allocation4 + $0x28] sm:$0xff]
    %v242 = vld [vmem:[#allocation4 + $0x30] sm:$0xff]
    %v243 = vld [vmem:[#allocation4 + $0x38] sm:$0xff]
    %v244 = vld [vmem:[#allocation4 + $0x40] sm:$0xff]
    %v245 = vld [vmem:[#allocation4 + $0x48] sm:$0xff]
    %v246 = vld [vmem:[#allocation4 + $0x50] sm:$0xff]
    %v247 = vld [vmem:[#allocation4 + $0x58] sm:$0xff]
    %v248 = vld [vmem:[#allocation4 + $0x60] sm:$0xff]
    %v249 = vld [vmem:[#allocation4 + $0x68] sm:$0xff]
    %v250 = vld [vmem:[#allocation4 + $0x70] sm:$0xff]
    %v251 = vld [vmem:[#allocation4 + $0x78] sm:$0xff]
    %v252 = vld [vmem:[#allocation4 + $0x80] sm:$0xff]
    %v253 = vld [vmem:[#allocation4 + $0x88] sm:$0xff]
    %v254 = vld [vmem:[#allocation4 + $0x90] sm:$0xff]
    %v255 = vld [vmem:[#allocation4 + $0x98] sm:$0xff]
    %v256 = vld [vmem:[#allocation4 + $0xa0] sm:$0xff]
    %v257 = vld [vmem:[#allocation4 + $0xa8] sm:$0xff]
    %v258 = vld [vmem:[#allocation4 + $0xb0] sm:$0xff]
    %v259 = vld [vmem:[#allocation4 + $0xb8] sm:$0xff]
    %v260 = vld [vmem:[#allocation4 + $0xc0] sm:$0xff]
    %v261 = vld [vmem:[#allocation4 + $0xc8] sm:$0xff]
    %v262 = vld [vmem:[#allocation4 + $0xd0] sm:$0xff]
    %v263 = vld [vmem:[#allocation4 + $0xd8] sm:$0xff]
    %v264 = vld [vmem:[#allocation4 + $0xe0] sm:$0xff]
    %v265 = vld [vmem:[#allocation4 + $0xe8] sm:$0xff]
    %v266 = vld [vmem:[#allocation4 + $0xf0] sm:$0xff]
    %v267 = vld [vmem:[#allocation4 + $0xf8] sm:$0xff]
    %v268 = vld [vmem:[#allocation4 + $0x100] sm:$0xff]
    %v269 = vld [vmem:[#allocation4 + $0x108] sm:$0xff]
    %v270 = vld [vmem:[#allocation4 + $0x110] sm:$0xff]
    %v271 = vld [vmem:[#allocation4 + $0x118] sm:$0xff]
    %v272 = vld [vmem:[#allocation4 + $0x120] sm:$0xff]
    %v273 = vld [vmem:[#allocation4 + $0x128] sm:$0xff]
    %v274 = vld [vmem:[#allocation4 + $0x130] sm:$0xff]
    %v275 = vld [vmem:[#allocation4 + $0x138] sm:$0xff]
    %v276 = vld [vmem:[#allocation4 + $0x140] sm:$0xff]
    %v277 = vld [vmem:[#allocation4 + $0x148] sm:$0xff]
    %v278 = vld [vmem:[#allocation4 + $0x150] sm:$0xff]
    %v279 = vld [vmem:[#allocation4 + $0x158] sm:$0xff]
    %v280 = vld [vmem:[#allocation4 + $0x160] sm:$0xff]
    %v281 = vld [vmem:[#allocation4 + $0x168] sm:$0xff]
    %v282 = vld [vmem:[#allocation4 + $0x170] sm:$0xff]
    %v283 = vld [vmem:[#allocation4 + $0x178] sm:$0xff]
    %v284 = vld [vmem:[%s4] sm:$0x1]
    %v285 = vld [vmem:[#allocation2] sm:$0x3]
    %286 = vmatprep.subr.mxu0 %v237
    %287 = vmatpush1.msra.mxu0 %v236
    %288 = vmatprep.subr.mxu0 %v240
    %289 = vmatpush1.msra.mxu0 %v239
    %290 = vmatprep.subr.mxu0 %v243
    %291 = vmatpush1.msra.mxu0 %v242
    %292 = vmatprep.subr.mxu0 %v246
    %293 = vmatpush1.msra.mxu0 %v245
    %294 = vmatprep.subr.mxu0 %v249
    %295 = vmatpush1.msra.mxu0 %v248
    %296 = vmatprep.subr.mxu0 %v252
    %297 = vmatpush1.msra.mxu0 %v251
    %298 = vmatprep.subr.mxu0 %v255
    %299 = vmatpush1.msra.mxu0 %v254
    %300 = vmatprep.subr.mxu0 %v258
    %301 = vmatpush1.msra.mxu0 %v257
    %302 = vmatprep.subr.mxu0 %v261
    %303 = vmatpush1.msra.mxu0 %v260
    %304 = vmatprep.subr.mxu0 %v264
    %305 = vmatpush1.msra.mxu0 %v263
    %306 = vmatprep.subr.mxu0 %v267
    %307 = vmatpush1.msra.mxu0 %v266
    %308 = vmatprep.subr.mxu0 %v270
    %309 = vmatpush1.msra.mxu0 %v269
    %310 = vmatprep.subr.mxu0 %v273
    %311 = vmatpush1.msra.mxu0 %v272
    %312 = vmatprep.subr.mxu0 %v276
    %313 = vmatpush1.msra.mxu0 %v275
    %314 = vmatprep.subr.mxu0 %v279
    %315 = vmatpush1.msra.mxu0 %v278
    %316 = vmatprep.subr.mxu0 %v282
    %317 = vmatpush1.msra.mxu0 %v281
    %318 = vmatprep.subr.mxu0 0.0
    %319 = vmatpush1.msra.mxu0 0.0
    %320 = vmatprep.subr.mxu0 0.0
    %321 = vmatpush1.msra.mxu0 0.0
    %322 = vmatprep.subr.mxu0 0.0
    %323 = vmatpush1.msra.mxu0 0.0
    %324 = vmatprep.subr.mxu0 0.0
    %325 = vmatpush1.msra.mxu0 0.0
    %326 = vmatprep.subr.mxu0 0.0
    %327 = vmatpush1.msra.mxu0 0.0
    %328 = vmatprep.subr.mxu0 0.0
    %329 = vmatpush1.msra.mxu0 0.0
    %330 = vmatprep.subr.mxu0 0.0
    %331 = vmatpush1.msra.mxu0 0.0
    %332 = vmatprep.subr.mxu0 0.0
    %333 = vmatpush1.msra.mxu0 0.0
    %334 = vmatprep.subr.mxu0 0.0
    %335 = vmatpush1.msra.mxu0 0.0
    %336 = vmatprep.subr.mxu0 0.0
    %337 = vmatpush1.msra.mxu0 0.0
    %338 = vmatprep.subr.mxu0 0.0
    %339 = vmatpush1.msra.mxu0 0.0
    %340 = vmatprep.subr.mxu0 0.0
    %341 = vmatpush1.msra.mxu0 0.0
    %342 = vmatprep.subr.mxu0 0.0
    %343 = vmatpush1.msra.mxu0 0.0
    %344 = vmatprep.subr.mxu0 0.0
    %345 = vmatpush1.msra.mxu0 0.0
    %346 = vmatprep.subr.mxu0 0.0
    %347 = vmatpush1.msra.mxu0 0.0
    %348 = vmatprep.subr.mxu0 0.0
    %349 = vmatpush1.msra.mxu0 0.0
    %350 = vmatprep.mubr.f32.mxu0 0.0
    %351 = vmatmul.mubr.f32.gmra.mrb[0].mxu0 %v285
    %v352 = vpop.f32.mrb[0].mxu0
    %v353 = vadd.f32 0.0, %v352
    %v354 = vpop.f32.mrb[0].mxu0
    %v355 = vadd.f32 0.0, %v354
    %356 = vdwg.mxu0
    %357 = vmatprep.subr.mxu0 0.0
    %358 = vmatpush1.msra.mxu0 %v238
    %359 = vmatprep.subr.mxu0 0.0
    %360 = vmatpush1.msra.mxu0 %v241
    %361 = vmatprep.subr.mxu0 0.0
    %362 = vmatpush1.msra.mxu0 %v244
    %363 = vmatprep.subr.mxu0 0.0
    %364 = vmatpush1.msra.mxu0 %v247
    %365 = vmatprep.subr.mxu0 0.0
    %366 = vmatpush1.msra.mxu0 %v250
    %367 = vmatprep.subr.mxu0 0.0
    %368 = vmatpush1.msra.mxu0 %v253
    %369 = vmatprep.subr.mxu0 0.0
    %370 = vmatpush1.msra.mxu0 %v256
    %371 = vmatprep.subr.mxu0 0.0
    %372 = vmatpush1.msra.mxu0 %v259
    %373 = vmatprep.subr.mxu0 0.0
    %374 = vmatpush1.msra.mxu0 %v262
    %375 = vmatprep.subr.mxu0 0.0
    %376 = vmatpush1.msra.mxu0 %v265
    %377 = vmatprep.subr.mxu0 0.0
    %378 = vmatpush1.msra.mxu0 %v268
    %379 = vmatprep.subr.mxu0 0.0
    %380 = vmatpush1.msra.mxu0 %v271
    %381 = vmatprep.subr.mxu0 0.0
    %382 = vmatpush1.msra.mxu0 %v274
    %383 = vmatprep.subr.mxu0 0.0
    %384 = vmatpush1.msra.mxu0 %v277
    %385 = vmatprep.subr.mxu0 0.0
    %386 = vmatpush1.msra.mxu0 %v280
    %387 = vmatprep.subr.mxu0 0.0
    %388 = vmatpush1.msra.mxu0 %v283
    %389 = vmatprep.subr.mxu0 0.0
    %390 = vmatpush1.msra.mxu0 0.0
    %391 = vmatprep.subr.mxu0 0.0
    %392 = vmatpush1.msra.mxu0 0.0
    %393 = vmatprep.subr.mxu0 0.0
    %394 = vmatpush1.msra.mxu0 0.0
    %395 = vmatprep.subr.mxu0 0.0
    %396 = vmatpush1.msra.mxu0 0.0
    %397 = vmatprep.subr.mxu0 0.0
    %398 = vmatpush1.msra.mxu0 0.0
    %399 = vmatprep.subr.mxu0 0.0
    %400 = vmatpush1.msra.mxu0 0.0
    %401 = vmatprep.subr.mxu0 0.0
    %402 = vmatpush1.msra.mxu0 0.0
    %403 = vmatprep.subr.mxu0 0.0
    %404 = vmatpush1.msra.mxu0 0.0
    %405 = vmatprep.subr.mxu0 0.0
    %406 = vmatpush1.msra.mxu0 0.0
    %407 = vmatprep.subr.mxu0 0.0
    %408 = vmatpush1.msra.mxu0 0.0
    %409 = vmatprep.subr.mxu0 0.0
    %410 = vmatpush1.msra.mxu0 0.0
    %411 = vmatprep.subr.mxu0 0.0
    %412 = vmatpush1.msra.mxu0 0.0
    %413 = vmatprep.subr.mxu0 0.0
    %414 = vmatpush1.msra.mxu0 0.0
    %415 = vmatprep.subr.mxu0 0.0
    %416 = vmatpush1.msra.mxu0 0.0
    %417 = vmatprep.subr.mxu0 0.0
    %418 = vmatpush1.msra.mxu0 0.0
    %419 = vmatprep.subr.mxu0 0.0
    %420 = vmatpush1.msra.mxu0 0.0
    %421 = vmatprep.mubr.f32.mxu0 0.0
    %422 = vmatmul.mubr.f32.gmra.mrb[0].mxu0 %v285
    %v423 = vpop.f32.mrb[0].mxu0
    %v424 = vadd.f32 0.0, %v423
    %v425 = vpop.f32.mrb[0].mxu0
    %426 = vdwg.mxu0
    %v428 = vrot.slane %v353, 1
    %v431 = vadd.f32 %v151, %v353
    %v432 = vadd.f32 %v157, %v428
    %v433 = vxor.u32 %v431, 2147483648
    %v434 = vxor.u32 %v432, 2147483648
    %v435 = vmul.f32 %v433, 1.442695
    %v436 = vpow.pop %v435
    %v437 = vmul.f32 %v434, 1.442695
    %v438 = vpow.pop %v437
    %v439 = vadd.f32 %v436, 1.0
    %v440 = vadd.f32 %v438, 1.0
    %v441 = vrcp.pop %v439
    %v442 = vmul.f32 1.0, %v441
    %v443 = vrcp.pop %v440
    %v444 = vmul.f32 1.0, %v443
    %v446 = vrot.slane %v355, 1
    %v449 = vadd.f32 %v153, %v355
    %v450 = vadd.f32 %v159, %v446
    %v451 = vxor.u32 %v449, 2147483648
    %v452 = vxor.u32 %v450, 2147483648
    %v453 = vmul.f32 %v451, 1.442695
    %v454 = vpow.pop %v453
    %v455 = vmul.f32 %v452, 1.442695
    %v456 = vpow.pop %v455
    %v457 = vadd.f32 %v454, 1.0
    %v458 = vadd.f32 %v456, 1.0
    %v459 = vrcp.pop %v457
    %v460 = vmul.f32 1.0, %v459
    %v461 = vrcp.pop %v458
    %v462 = vmul.f32 1.0, %v461
    %v464 = vlaneseq
    %v465 = vshrl.u32 %v464, 7
    %v466 = vsub.s32 0, %v465
    %v467 = vrot.slane %v284, %v466
    %v469 = vadd.f32 %v424, %v467
    %v471 = vrot.slane %v469, 1
    %v474 = vmul.f32 %v442, %v469
    %v475 = vmul.f32 %v444, %v471
    %v476 = vadd.f32 %v228, %v474
    %v477 = vadd.f32 %v233, %v475
    %v478 = vtanh.pop %v476
    %v479 = vtanh.pop %v477
    %v480 = vsub.f32 1.0, %v460
    %v481 = vsub.f32 1.0, %v462
    %v482 = vmul.f32 %v480, %v478
    %v483 = vmul.f32 %v481, %v479
    %v485 = vrot.slane %v285, 1
    %v488 = vmul.f32 %v460, %v285
    %v489 = vmul.f32 %v462, %v485
    %v490 = vadd.f32 %v482, %v488
    %v491 = vadd.f32 %v483, %v489
    %492 = vst [vmem:[#allocation3] sm:$0x1] %v490
    %493 = vst [vmem:[#allocation3 + $0x8] sm:$0x1] %v491
    %v496 = vrot.slane %v491, 7
    %vm497 = vcmask 1041409
    %v498 = vsel %vm497, %v496, %v490
    %500 = vmatprep.subr.mxu0 %v237
    %501 = vmatpush1.msra.mxu0 %v236
    %502 = vmatprep.subr.mxu0 %v240
    %503 = vmatpush1.msra.mxu0 %v239
    %504 = vmatprep.subr.mxu0 %v243
    %505 = vmatpush1.msra.mxu0 %v242
    %506 = vmatprep.subr.mxu0 %v246
    %507 = vmatpush1.msra.mxu0 %v245
    %508 = vmatprep.subr.mxu0 %v249
    %509 = vmatpush1.msra.mxu0 %v248
    %510 = vmatprep.subr.mxu0 %v252
    %511 = vmatpush1.msra.mxu0 %v251
    %512 = vmatprep.subr.mxu0 %v255
    %513 = vmatpush1.msra.mxu0 %v254
    %514 = vmatprep.subr.mxu0 %v258
    %515 = vmatpush1.msra.mxu0 %v257
    %516 = vmatprep.subr.mxu0 %v261
    %517 = vmatpush1.msra.mxu0 %v260
    %518 = vmatprep.subr.mxu0 %v264
    %519 = vmatpush1.msra.mxu0 %v263
    %520 = vmatprep.subr.mxu0 %v267
    %521 = vmatpush1.msra.mxu0 %v266
    %522 = vmatprep.subr.mxu0 %v270
    %523 = vmatpush1.msra.mxu0 %v269
    %524 = vmatprep.subr.mxu0 %v273
    %525 = vmatpush1.msra.mxu0 %v272
    %526 = vmatprep.subr.mxu0 %v276
    %527 = vmatpush1.msra.mxu0 %v275
    %528 = vmatprep.subr.mxu0 %v279
    %529 = vmatpush1.msra.mxu0 %v278
    %530 = vmatprep.subr.mxu0 %v282
    %531 = vmatpush1.msra.mxu0 %v281
    %532 = vmatprep.subr.mxu0 0.0
    %533 = vmatpush1.msra.mxu0 0.0
    %534 = vmatprep.subr.mxu0 0.0
    %535 = vmatpush1.msra.mxu0 0.0
    %536 = vmatprep.subr.mxu0 0.0
    %537 = vmatpush1.msra.mxu0 0.0
    %538 = vmatprep.subr.mxu0 0.0
    %539 = vmatpush1.msra.mxu0 0.0
    %540 = vmatprep.subr.mxu0 0.0
    %541 = vmatpush1.msra.mxu0 0.0
    %542 = vmatprep.subr.mxu0 0.0
    %543 = vmatpush1.msra.mxu0 0.0
    %544 = vmatprep.subr.mxu0 0.0
    %545 = vmatpush1.msra.mxu0 0.0
    %546 = vmatprep.subr.mxu0 0.0
    %547 = vmatpush1.msra.mxu0 0.0
    %548 = vmatprep.subr.mxu0 0.0
    %549 = vmatpush1.msra.mxu0 0.0
    %550 = vmatprep.subr.mxu0 0.0
    %551 = vmatpush1.msra.mxu0 0.0
    %552 = vmatprep.subr.mxu0 0.0
    %553 = vmatpush1.msra.mxu0 0.0
    %554 = vmatprep.subr.mxu0 0.0
    %555 = vmatpush1.msra.mxu0 0.0
    %556 = vmatprep.subr.mxu0 0.0
    %557 = vmatpush1.msra.mxu0 0.0
    %558 = vmatprep.subr.mxu0 0.0
    %559 = vmatpush1.msra.mxu0 0.0
    %560 = vmatprep.subr.mxu0 0.0
    %561 = vmatpush1.msra.mxu0 0.0
    %562 = vmatprep.subr.mxu0 0.0
    %563 = vmatpush1.msra.mxu0 0.0
    %564 = vmatprep.mubr.f32.mxu0 0.0
    %565 = vmatmul.mubr.f32.gmra.mrb[0].mxu0 %v498
    %v566 = vpop.f32.mrb[0].mxu0
    %v567 = vadd.f32 0.0, %v566
    %v568 = vpop.f32.mrb[0].mxu0
    %v569 = vadd.f32 0.0, %v568
    %570 = vdwg.mxu0
    %571 = vmatprep.subr.mxu0 0.0
    %572 = vmatpush1.msra.mxu0 %v238
    %573 = vmatprep.subr.mxu0 0.0
    %574 = vmatpush1.msra.mxu0 %v241
    %575 = vmatprep.subr.mxu0 0.0
    %576 = vmatpush1.msra.mxu0 %v244
    %577 = vmatprep.subr.mxu0 0.0
    %578 = vmatpush1.msra.mxu0 %v247
    %579 = vmatprep.subr.mxu0 0.0
    %580 = vmatpush1.msra.mxu0 %v250
    %581 = vmatprep.subr.mxu0 0.0
    %582 = vmatpush1.msra.mxu0 %v253
    %583 = vmatprep.subr.mxu0 0.0
    %584 = vmatpush1.msra.mxu0 %v256
    %585 = vmatprep.subr.mxu0 0.0
    %586 = vmatpush1.msra.mxu0 %v259
    %587 = vmatprep.subr.mxu0 0.0
    %588 = vmatpush1.msra.mxu0 %v262
    %589 = vmatprep.subr.mxu0 0.0
    %590 = vmatpush1.msra.mxu0 %v265
    %591 = vmatprep.subr.mxu0 0.0
    %592 = vmatpush1.msra.mxu0 %v268
    %593 = vmatprep.subr.mxu0 0.0
    %594 = vmatpush1.msra.mxu0 %v271
    %595 = vmatprep.subr.mxu0 0.0
    %596 = vmatpush1.msra.mxu0 %v274
    %597 = vmatprep.subr.mxu0 0.0
    %598 = vmatpush1.msra.mxu0 %v277
    %599 = vmatprep.subr.mxu0 0.0
    %600 = vmatpush1.msra.mxu0 %v280
    %601 = vmatprep.subr.mxu0 0.0
    %602 = vmatpush1.msra.mxu0 %v283
    %603 = vmatprep.subr.mxu0 0.0
    %604 = vmatpush1.msra.mxu0 0.0
    %605 = vmatprep.subr.mxu0 0.0
    %606 = vmatpush1.msra.mxu0 0.0
    %607 = vmatprep.subr.mxu0 0.0
    %608 = vmatpush1.msra.mxu0 0.0
    %609 = vmatprep.subr.mxu0 0.0
    %610 = vmatpush1.msra.mxu0 0.0
    %611 = vmatprep.subr.mxu0 0.0
    %612 = vmatpush1.msra.mxu0 0.0
    %613 = vmatprep.subr.mxu0 0.0
    %614 = vmatpush1.msra.mxu0 0.0
    %615 = vmatprep.subr.mxu0 0.0
    %616 = vmatpush1.msra.mxu0 0.0
    %617 = vmatprep.subr.mxu0 0.0
    %618 = vmatpush1.msra.mxu0 0.0
    %619 = vmatprep.subr.mxu0 0.0
    %620 = vmatpush1.msra.mxu0 0.0
    %621 = vmatprep.subr.mxu0 0.0
    %622 = vmatpush1.msra.mxu0 0.0
    %623 = vmatprep.subr.mxu0 0.0
    %624 = vmatpush1.msra.mxu0 0.0
    %625 = vmatprep.subr.mxu0 0.0
    %626 = vmatpush1.msra.mxu0 0.0
    %627 = vmatprep.subr.mxu0 0.0
    %628 = vmatpush1.msra.mxu0 0.0
    %629 = vmatprep.subr.mxu0 0.0
    %630 = vmatpush1.msra.mxu0 0.0
    %631 = vmatprep.subr.mxu0 0.0
    %632 = vmatpush1.msra.mxu0 0.0
    %633 = vmatprep.subr.mxu0 0.0
    %634 = vmatpush1.msra.mxu0 0.0
    %635 = vmatprep.mubr.f32.mxu0 0.0
    %636 = vmatmul.mubr.f32.gmra.mrb[0].mxu0 %v498
    %v637 = vpop.f32.mrb[0].mxu0
    %v638 = vadd.f32 0.0, %v637
    %v639 = vpop.f32.mrb[0].mxu0
    %640 = vdwg.mxu0
    %v642 = vrot.slane %v567, 7
    %v645 = vadd.f32 %v151, %v642
    %v646 = vadd.f32 %v157, %v567
    %v647 = vxor.u32 %v645, 2147483648
    %v648 = vxor.u32 %v646, 2147483648
    %v649 = vmul.f32 %v647, 1.442695
    %v650 = vpow.pop %v649
    %v651 = vmul.f32 %v648, 1.442695
    %v652 = vpow.pop %v651
    %v653 = vadd.f32 %v650, 1.0
    %v654 = vadd.f32 %v652, 1.0
    %v655 = vrcp.pop %v653
    %v656 = vmul.f32 1.0, %v655
    %v657 = vrcp.pop %v654
    %v658 = vmul.f32 1.0, %v657
    %v660 = vrot.slane %v569, 7
    %v663 = vadd.f32 %v153, %v660
    %v664 = vadd.f32 %v159, %v569
    %v665 = vxor.u32 %v663, 2147483648
    %v666 = vxor.u32 %v664, 2147483648
    %v667 = vmul.f32 %v665, 1.442695
    %v668 = vpow.pop %v667
    %v669 = vmul.f32 %v666, 1.442695
    %v670 = vpow.pop %v669
    %v671 = vadd.f32 %v668, 1.0
    %v672 = vadd.f32 %v670, 1.0
    %v673 = vrcp.pop %v671
    %v674 = vmul.f32 1.0, %v673
    %v675 = vrcp.pop %v672
    %v676 = vmul.f32 1.0, %v675
    %v677 = vadd.f32 %v638, %v467
    %v679 = vrot.slane %v677, 7
    %v682 = vmul.f32 %v656, %v679
    %v683 = vmul.f32 %v658, %v677
    %v684 = vadd.f32 %v228, %v682
    %v685 = vadd.f32 %v233, %v683
    %v686 = vtanh.pop %v684
    %v687 = vtanh.pop %v685
    %v688 = vsub.f32 1.0, %v674
    %v689 = vsub.f32 1.0, %v676
    %v690 = vmul.f32 %v688, %v686
    %v691 = vmul.f32 %v689, %v687
    %v692 = vrot.slane %v490, 7
    %v695 = vmul.f32 %v674, %v692
    %v696 = vmul.f32 %v676, %v496
    %v697 = vadd.f32 %v690, %v695
    %v698 = vadd.f32 %v691, %v696
    %699 = vst [vmem:[#allocation3] sm:$0x2] %v697
    %700 = vst [vmem:[#allocation3 + $0x8] sm:$0x2] %v698
    %v703 = vrot.slane %v697, 1
    %v704 = vsel %vm497, %v698, %v703
    %706 = vmatprep.subr.mxu0 %v237
    %707 = vmatpush1.msra.mxu0 %v236
    %708 = vmatprep.subr.mxu0 %v240
    %709 = vmatpush1.msra.mxu0 %v239
    %710 = vmatprep.subr.mxu0 %v243
    %711 = vmatpush1.msra.mxu0 %v242
    %712 = vmatprep.subr.mxu0 %v246
    %713 = vmatpush1.msra.mxu0 %v245
    %714 = vmatprep.subr.mxu0 %v249
    %715 = vmatpush1.msra.mxu0 %v248
    %716 = vmatprep.subr.mxu0 %v252
    %717 = vmatpush1.msra.mxu0 %v251
    %718 = vmatprep.subr.mxu0 %v255
    %719 = vmatpush1.msra.mxu0 %v254
    %720 = vmatprep.subr.mxu0 %v258
    %721 = vmatpush1.msra.mxu0 %v257
    %722 = vmatprep.subr.mxu0 %v261
    %723 = vmatpush1.msra.mxu0 %v260
    %724 = vmatprep.subr.mxu0 %v264
    %725 = vmatpush1.msra.mxu0 %v263
    %726 = vmatprep.subr.mxu0 %v267
    %727 = vmatpush1.msra.mxu0 %v266
    %728 = vmatprep.subr.mxu0 %v270
    %729 = vmatpush1.msra.mxu0 %v269
    %730 = vmatprep.subr.mxu0 %v273
    %731 = vmatpush1.msra.mxu0 %v272
    %732 = vmatprep.subr.mxu0 %v276
    %733 = vmatpush1.msra.mxu0 %v275
    %734 = vmatprep.subr.mxu0 %v279
    %735 = vmatpush1.msra.mxu0 %v278
    %736 = vmatprep.subr.mxu0 %v282
    %737 = vmatpush1.msra.mxu0 %v281
    %738 = vmatprep.subr.mxu0 0.0
    %739 = vmatpush1.msra.mxu0 0.0
    %740 = vmatprep.subr.mxu0 0.0
    %741 = vmatpush1.msra.mxu0 0.0
    %742 = vmatprep.subr.mxu0 0.0
    %743 = vmatpush1.msra.mxu0 0.0
    %744 = vmatprep.subr.mxu0 0.0
    %745 = vmatpush1.msra.mxu0 0.0
    %746 = vmatprep.subr.mxu0 0.0
    %747 = vmatpush1.msra.mxu0 0.0
    %748 = vmatprep.subr.mxu0 0.0
    %749 = vmatpush1.msra.mxu0 0.0
    %750 = vmatprep.subr.mxu0 0.0
    %751 = vmatpush1.msra.mxu0 0.0
    %752 = vmatprep.subr.mxu0 0.0
    %753 = vmatpush1.msra.mxu0 0.0
    %754 = vmatprep.subr.mxu0 0.0
    %755 = vmatpush1.msra.mxu0 0.0
    %756 = vmatprep.subr.mxu0 0.0
    %757 = vmatpush1.msra.mxu0 0.0
    %758 = vmatprep.subr.mxu0 0.0
    %759 = vmatpush1.msra.mxu0 0.0
    %760 = vmatprep.subr.mxu0 0.0
    %761 = vmatpush1.msra.mxu0 0.0
    %762 = vmatprep.subr.mxu0 0.0
    %763 = vmatpush1.msra.mxu0 0.0
    %764 = vmatprep.subr.mxu0 0.0
    %765 = vmatpush1.msra.mxu0 0.0
    %766 = vmatprep.subr.mxu0 0.0
    %767 = vmatpush1.msra.mxu0 0.0
    %768 = vmatprep.subr.mxu0 0.0
    %769 = vmatpush1.msra.mxu0 0.0
    %770 = vmatprep.mubr.f32.mxu0 0.0
    %771 = vmatmul.mubr.f32.gmra.mrb[0].mxu0 %v704
    %v772 = vpop.f32.mrb[0].mxu0
    %v773 = vadd.f32 0.0, %v772
    %v774 = vpop.f32.mrb[0].mxu0
    %v775 = vadd.f32 0.0, %v774
    %776 = vdwg.mxu0
    %777 = vmatprep.subr.mxu0 0.0
    %778 = vmatpush1.msra.mxu0 %v238
    %779 = vmatprep.subr.mxu0 0.0
    %780 = vmatpush1.msra.mxu0 %v241
    %781 = vmatprep.subr.mxu0 0.0
    %782 = vmatpush1.msra.mxu0 %v244
    %783 = vmatprep.subr.mxu0 0.0
    %784 = vmatpush1.msra.mxu0 %v247
    %785 = vmatprep.subr.mxu0 0.0
    %786 = vmatpush1.msra.mxu0 %v250
    %787 = vmatprep.subr.mxu0 0.0
    %788 = vmatpush1.msra.mxu0 %v253
    %789 = vmatprep.subr.mxu0 0.0
    %790 = vmatpush1.msra.mxu0 %v256
    %791 = vmatprep.subr.mxu0 0.0
    %792 = vmatpush1.msra.mxu0 %v259
    %793 = vmatprep.subr.mxu0 0.0
    %794 = vmatpush1.msra.mxu0 %v262
    %795 = vmatprep.subr.mxu0 0.0
    %796 = vmatpush1.msra.mxu0 %v265
    %797 = vmatprep.subr.mxu0 0.0
    %798 = vmatpush1.msra.mxu0 %v268
    %799 = vmatprep.subr.mxu0 0.0
    %800 = vmatpush1.msra.mxu0 %v271
    %801 = vmatprep.subr.mxu0 0.0
    %802 = vmatpush1.msra.mxu0 %v274
    %803 = vmatprep.subr.mxu0 0.0
    %804 = vmatpush1.msra.mxu0 %v277
    %805 = vmatprep.subr.mxu0 0.0
    %806 = vmatpush1.msra.mxu0 %v280
    %807 = vmatprep.subr.mxu0 0.0
    %808 = vmatpush1.msra.mxu0 %v283
    %809 = vmatprep.subr.mxu0 0.0
    %810 = vmatpush1.msra.mxu0 0.0
    %811 = vmatprep.subr.mxu0 0.0
    %812 = vmatpush1.msra.mxu0 0.0
    %813 = vmatprep.subr.mxu0 0.0
    %814 = vmatpush1.msra.mxu0 0.0
    %815 = vmatprep.subr.mxu0 0.0
    %816 = vmatpush1.msra.mxu0 0.0
    %817 = vmatprep.subr.mxu0 0.0
    %818 = vmatpush1.msra.mxu0 0.0
    %819 = vmatprep.subr.mxu0 0.0
    %820 = vmatpush1.msra.mxu0 0.0
    %821 = vmatprep.subr.mxu0 0.0
    %822 = vmatpush1.msra.mxu0 0.0
    %823 = vmatprep.subr.mxu0 0.0
    %824 = vmatpush1.msra.mxu0 0.0
    %825 = vmatprep.subr.mxu0 0.0
    %826 = vmatpush1.msra.mxu0 0.0
    %827 = vmatprep.subr.mxu0 0.0
    %828 = vmatpush1.msra.mxu0 0.0
    %829 = vmatprep.subr.mxu0 0.0
    %830 = vmatpush1.msra.mxu0 0.0
    %831 = vmatprep.subr.mxu0 0.0
    %832 = vmatpush1.msra.mxu0 0.0
    %833 = vmatprep.subr.mxu0 0.0
    %834 = vmatpush1.msra.mxu0 0.0
    %835 = vmatprep.subr.mxu0 0.0
    %836 = vmatpush1.msra.mxu0 0.0
    %837 = vmatprep.subr.mxu0 0.0
    %838 = vmatpush1.msra.mxu0 0.0
    %839 = vmatprep.subr.mxu0 0.0
    %840 = vmatpush1.msra.mxu0 0.0
    %841 = vmatprep.mubr.f32.mxu0 0.0
    %842 = vmatmul.mubr.f32.gmra.mrb[0].mxu0 %v704
    %v843 = vpop.f32.mrb[0].mxu0
    %v844 = vadd.f32 0.0, %v843
    %v845 = vpop.f32.mrb[0].mxu0
    %846 = vdwg.mxu0
    %v848 = vrot.slane %v773, 6
    %v849 = vrot.slane %v773, 7
    %v852 = vadd.f32 %v151, %v848
    %v853 = vadd.f32 %v157, %v849
    %v854 = vxor.u32 %v852, 2147483648
    %v855 = vxor.u32 %v853, 2147483648
    %v856 = vmul.f32 %v854, 1.442695
    %v857 = vpow.pop %v856
    %v858 = vmul.f32 %v855, 1.442695
    %v859 = vpow.pop %v858
    %v860 = vadd.f32 %v857, 1.0
    %v861 = vadd.f32 %v859, 1.0
    %v862 = vrcp.pop %v860
    %v863 = vmul.f32 1.0, %v862
    %v864 = vrcp.pop %v861
    %v865 = vmul.f32 1.0, %v864
    %v867 = vrot.slane %v775, 6
    %v868 = vrot.slane %v775, 7
    %v871 = vadd.f32 %v153, %v867
    %v872 = vadd.f32 %v159, %v868
    %v873 = vxor.u32 %v871, 2147483648
    %v874 = vxor.u32 %v872, 2147483648
    %v875 = vmul.f32 %v873, 1.442695
    %v876 = vpow.pop %v875
    %v877 = vmul.f32 %v874, 1.442695
    %v878 = vpow.pop %v877
    %v879 = vadd.f32 %v876, 1.0
    %v880 = vadd.f32 %v878, 1.0
    %v881 = vrcp.pop %v879
    %v882 = vmul.f32 1.0, %v881
    %v883 = vrcp.pop %v880
    %v884 = vmul.f32 1.0, %v883
    %v885 = vadd.f32 %v844, %v467
    %v887 = vrot.slane %v885, 6
    %v888 = vrot.slane %v885, 7
    %v891 = vmul.f32 %v863, %v887
    %v892 = vmul.f32 %v865, %v888
    %v893 = vadd.f32 %v228, %v891
    %v894 = vadd.f32 %v233, %v892
    %v895 = vtanh.pop %v893
    %v896 = vtanh.pop %v894
    %v897 = vsub.f32 1.0, %v882
    %v898 = vsub.f32 1.0, %v884
    %v899 = vmul.f32 %v897, %v895
    %v900 = vmul.f32 %v898, %v896
    %v901 = vrot.slane %v697, 7
    %v902 = vrot.slane %v698, 7
    %v905 = vmul.f32 %v882, %v901
    %v906 = vmul.f32 %v884, %v902
    %v907 = vadd.f32 %v899, %v905
    %v908 = vadd.f32 %v900, %v906
    %909 = vst [vmem:[#allocation3] sm:$0x4] %v907
    %910 = vst [vmem:[#allocation3 + $0x8] sm:$0x4] %v908
    %v913 = vrot.slane %v907, 2
    %v914 = vrot.slane %v908, 1
    %v915 = vsel %vm497, %v914, %v913
    %917 = vmatprep.subr.mxu0 %v237
    %918 = vmatpush1.msra.mxu0 %v236
    %919 = vmatprep.subr.mxu0 %v240
    %920 = vmatpush1.msra.mxu0 %v239
    %921 = vmatprep.subr.mxu0 %v243
    %922 = vmatpush1.msra.mxu0 %v242
    %923 = vmatprep.subr.mxu0 %v246
    %924 = vmatpush1.msra.mxu0 %v245
    %925 = vmatprep.subr.mxu0 %v249
    %926 = vmatpush1.msra.mxu0 %v248
    %927 = vmatprep.subr.mxu0 %v252
    %928 = vmatpush1.msra.mxu0 %v251
    %929 = vmatprep.subr.mxu0 %v255
    %930 = vmatpush1.msra.mxu0 %v254
    %931 = vmatprep.subr.mxu0 %v258
    %932 = vmatpush1.msra.mxu0 %v257
    %933 = vmatprep.subr.mxu0 %v261
    %934 = vmatpush1.msra.mxu0 %v260
    %935 = vmatprep.subr.mxu0 %v264
    %936 = vmatpush1.msra.mxu0 %v263
    %937 = vmatprep.subr.mxu0 %v267
    %938 = vmatpush1.msra.mxu0 %v266
    %939 = vmatprep.subr.mxu0 %v270
    %940 = vmatpush1.msra.mxu0 %v269
    %941 = vmatprep.subr.mxu0 %v273
    %942 = vmatpush1.msra.mxu0 %v272
    %943 = vmatprep.subr.mxu0 %v276
    %944 = vmatpush1.msra.mxu0 %v275
    %945 = vmatprep.subr.mxu0 %v279
    %946 = vmatpush1.msra.mxu0 %v278
    %947 = vmatprep.subr.mxu0 %v282
    %948 = vmatpush1.msra.mxu0 %v281
    %949 = vmatprep.subr.mxu0 0.0
    %950 = vmatpush1.msra.mxu0 0.0
    %951 = vmatprep.subr.mxu0 0.0
    %952 = vmatpush1.msra.mxu0 0.0
    %953 = vmatprep.subr.mxu0 0.0
    %954 = vmatpush1.msra.mxu0 0.0
    %955 = vmatprep.subr.mxu0 0.0
    %956 = vmatpush1.msra.mxu0 0.0
    %957 = vmatprep.subr.mxu0 0.0
    %958 = vmatpush1.msra.mxu0 0.0
    %959 = vmatprep.subr.mxu0 0.0
    %960 = vmatpush1.msra.mxu0 0.0
    %961 = vmatprep.subr.mxu0 0.0
    %962 = vmatpush1.msra.mxu0 0.0
    %963 = vmatprep.subr.mxu0 0.0
    %964 = vmatpush1.msra.mxu0 0.0
    %965 = vmatprep.subr.mxu0 0.0
    %966 = vmatpush1.msra.mxu0 0.0
    %967 = vmatprep.subr.mxu0 0.0
    %968 = vmatpush1.msra.mxu0 0.0
    %969 = vmatprep.subr.mxu0 0.0
    %970 = vmatpush1.msra.mxu0 0.0
    %971 = vmatprep.subr.mxu0 0.0
    %972 = vmatpush1.msra.mxu0 0.0
    %973 = vmatprep.subr.mxu0 0.0
    %974 = vmatpush1.msra.mxu0 0.0
    %975 = vmatprep.subr.mxu0 0.0
    %976 = vmatpush1.msra.mxu0 0.0
    %977 = vmatprep.subr.mxu0 0.0
    %978 = vmatpush1.msra.mxu0 0.0
    %979 = vmatprep.subr.mxu0 0.0
    %980 = vmatpush1.msra.mxu0 0.0
    %981 = vmatprep.mubr.f32.mxu0 0.0
    %982 = vmatmul.mubr.f32.gmra.mrb[0].mxu0 %v915
    %v983 = vpop.f32.mrb[0].mxu0
    %v984 = vadd.f32 0.0, %v983
    %v985 = vpop.f32.mrb[0].mxu0
    %v986 = vadd.f32 0.0, %v985
    %987 = vdwg.mxu0
    %988 = vmatprep.subr.mxu0 0.0
    %989 = vmatpush1.msra.mxu0 %v238
    %990 = vmatprep.subr.mxu0 0.0
    %991 = vmatpush1.msra.mxu0 %v241
    %992 = vmatprep.subr.mxu0 0.0
    %993 = vmatpush1.msra.mxu0 %v244
    %994 = vmatprep.subr.mxu0 0.0
    %995 = vmatpush1.msra.mxu0 %v247
    %996 = vmatprep.subr.mxu0 0.0
    %997 = vmatpush1.msra.mxu0 %v250
    %998 = vmatprep.subr.mxu0 0.0
    %999 = vmatpush1.msra.mxu0 %v253
    %1000 = vmatprep.subr.mxu0 0.0
    %1001 = vmatpush1.msra.mxu0 %v256
    %1002 = vmatprep.subr.mxu0 0.0
    %1003 = vmatpush1.msra.mxu0 %v259
    %1004 = vmatprep.subr.mxu0 0.0
    %1005 = vmatpush1.msra.mxu0 %v262
    %1006 = vmatprep.subr.mxu0 0.0
    %1007 = vmatpush1.msra.mxu0 %v265
    %1008 = vmatprep.subr.mxu0 0.0
    %1009 = vmatpush1.msra.mxu0 %v268
    %1010 = vmatprep.subr.mxu0 0.0
    %1011 = vmatpush1.msra.mxu0 %v271
    %1012 = vmatprep.subr.mxu0 0.0
    %1013 = vmatpush1.msra.mxu0 %v274
    %1014 = vmatprep.subr.mxu0 0.0
    %1015 = vmatpush1.msra.mxu0 %v277
    %1016 = vmatprep.subr.mxu0 0.0
    %1017 = vmatpush1.msra.mxu0 %v280
    %1018 = vmatprep.subr.mxu0 0.0
    %1019 = vmatpush1.msra.mxu0 %v283
    %1020 = vmatprep.subr.mxu0 0.0
    %1021 = vmatpush1.msra.mxu0 0.0
    %1022 = vmatprep.subr.mxu0 0.0
    %1023 = vmatpush1.msra.mxu0 0.0
    %1024 = vmatprep.subr.mxu0 0.0
    %1025 = vmatpush1.msra.mxu0 0.0
    %1026 = vmatprep.subr.mxu0 0.0
    %1027 = vmatpush1.msra.mxu0 0.0
    %1028 = vmatprep.subr.mxu0 0.0
    %1029 = vmatpush1.msra.mxu0 0.0
    %1030 = vmatprep.subr.mxu0 0.0
    %1031 = vmatpush1.msra.mxu0 0.0
    %1032 = vmatprep.subr.mxu0 0.0
    %1033 = vmatpush1.msra.mxu0 0.0
    %1034 = vmatprep.subr.mxu0 0.0
    %1035 = vmatpush1.msra.mxu0 0.0
    %1036 = vmatprep.subr.mxu0 0.0
    %1037 = vmatpush1.msra.mxu0 0.0
    %1038 = vmatprep.subr.mxu0 0.0
    %1039 = vmatpush1.msra.mxu0 0.0
    %1040 = vmatprep.subr.mxu0 0.0
    %1041 = vmatpush1.msra.mxu0 0.0
    %1042 = vmatprep.subr.mxu0 0.0
    %1043 = vmatpush1.msra.mxu0 0.0
    %1044 = vmatprep.subr.mxu0 0.0
    %1045 = vmatpush1.msra.mxu0 0.0
    %1046 = vmatprep.subr.mxu0 0.0
    %1047 = vmatpush1.msra.mxu0 0.0
    %1048 = vmatprep.subr.mxu0 0.0
    %1049 = vmatpush1.msra.mxu0 0.0
    %1050 = vmatprep.subr.mxu0 0.0
    %1051 = vmatpush1.msra.mxu0 0.0
    %1052 = vmatprep.mubr.f32.mxu0 0.0
    %1053 = vmatmul.mubr.f32.gmra.mrb[0].mxu0 %v915
    %v1054 = vpop.f32.mrb[0].mxu0
    %v1055 = vadd.f32 0.0, %v1054
    %v1056 = vpop.f32.mrb[0].mxu0
    %1057 = vdwg.mxu0
    %v1059 = vrot.slane %v984, 5
    %v1060 = vrot.slane %v984, 6
    %v1063 = vadd.f32 %v151, %v1059
    %v1064 = vadd.f32 %v157, %v1060
    %v1065 = vxor.u32 %v1063, 2147483648
    %v1066 = vxor.u32 %v1064, 2147483648
    %v1067 = vmul.f32 %v1065, 1.442695
    %v1068 = vpow.pop %v1067
    %v1069 = vmul.f32 %v1066, 1.442695
    %v1070 = vpow.pop %v1069
    %v1071 = vadd.f32 %v1068, 1.0
    %v1072 = vadd.f32 %v1070, 1.0
    %v1073 = vrcp.pop %v1071
    %v1074 = vmul.f32 1.0, %v1073
    %v1075 = vrcp.pop %v1072
    %v1076 = vmul.f32 1.0, %v1075
    %v1078 = vrot.slane %v986, 5
    %v1079 = vrot.slane %v986, 6
    %v1082 = vadd.f32 %v153, %v1078
    %v1083 = vadd.f32 %v159, %v1079
    %v1084 = vxor.u32 %v1082, 2147483648
    %v1085 = vxor.u32 %v1083, 2147483648
    %v1086 = vmul.f32 %v1084, 1.442695
    %v1087 = vpow.pop %v1086
    %v1088 = vmul.f32 %v1085, 1.442695
    %v1089 = vpow.pop %v1088
    %v1090 = vadd.f32 %v1087, 1.0
    %v1091 = vadd.f32 %v1089, 1.0
    %v1092 = vrcp.pop %v1090
    %v1093 = vmul.f32 1.0, %v1092
    %v1094 = vrcp.pop %v1091
    %v1095 = vmul.f32 1.0, %v1094
    %v1096 = vadd.f32 %v1055, %v467
    %v1098 = vrot.slane %v1096, 5
    %v1099 = vrot.slane %v1096, 6
    %v1102 = vmul.f32 %v1074, %v1098
    %v1103 = vmul.f32 %v1076, %v1099
    %v1104 = vadd.f32 %v228, %v1102
    %v1105 = vadd.f32 %v233, %v1103
    %v1106 = vtanh.pop %v1104
    %v1107 = vtanh.pop %v1105
    %v1108 = vsub.f32 1.0, %v1093
    %v1109 = vsub.f32 1.0, %v1095
    %v1110 = vmul.f32 %v1108, %v1106
    %v1111 = vmul.f32 %v1109, %v1107
    %v1112 = vrot.slane %v907, 7
    %v1113 = vrot.slane %v908, 7
    %v1116 = vmul.f32 %v1093, %v1112
    %v1117 = vmul.f32 %v1095, %v1113
    %v1118 = vadd.f32 %v1110, %v1116
    %v1119 = vadd.f32 %v1111, %v1117
    %1120 = vst [vmem:[#allocation3] sm:$0x8] %v1118
    %1121 = vst [vmem:[#allocation3 + $0x8] sm:$0x8] %v1119
    %v1124 = vrot.slane %v1118, 3
    %v1125 = vrot.slane %v1119, 2
    %v1126 = vsel %vm497, %v1125, %v1124
    %1128 = vmatprep.subr.mxu0 %v237
    %1129 = vmatpush1.msra.mxu0 %v236
    %1130 = vmatprep.subr.mxu0 %v240
    %1131 = vmatpush1.msra.mxu0 %v239
    %1132 = vmatprep.subr.mxu0 %v243
    %1133 = vmatpush1.msra.mxu0 %v242
    %1134 = vmatprep.subr.mxu0 %v246
    %1135 = vmatpush1.msra.mxu0 %v245
    %1136 = vmatprep.subr.mxu0 %v249
    %1137 = vmatpush1.msra.mxu0 %v248
    %1138 = vmatprep.subr.mxu0 %v252
    %1139 = vmatpush1.msra.mxu0 %v251
    %1140 = vmatprep.subr.mxu0 %v255
    %1141 = vmatpush1.msra.mxu0 %v254
    %1142 = vmatprep.subr.mxu0 %v258
    %1143 = vmatpush1.msra.mxu0 %v257
    %1144 = vmatprep.subr.mxu0 %v261
    %1145 = vmatpush1.msra.mxu0 %v260
    %1146 = vmatprep.subr.mxu0 %v264
    %1147 = vmatpush1.msra.mxu0 %v263
    %1148 = vmatprep.subr.mxu0 %v267
    %1149 = vmatpush1.msra.mxu0 %v266
    %1150 = vmatprep.subr.mxu0 %v270
    %1151 = vmatpush1.msra.mxu0 %v269
    %1152 = vmatprep.subr.mxu0 %v273
    %1153 = vmatpush1.msra.mxu0 %v272
    %1154 = vmatprep.subr.mxu0 %v276
    %1155 = vmatpush1.msra.mxu0 %v275
    %1156 = vmatprep.subr.mxu0 %v279
    %1157 = vmatpush1.msra.mxu0 %v278
    %1158 = vmatprep.subr.mxu0 %v282
    %1159 = vmatpush1.msra.mxu0 %v281
    %1160 = vmatprep.subr.mxu0 0.0
    %1161 = vmatpush1.msra.mxu0 0.0
    %1162 = vmatprep.subr.mxu0 0.0
    %1163 = vmatpush1.msra.mxu0 0.0
    %1164 = vmatprep.subr.mxu0 0.0
    %1165 = vmatpush1.msra.mxu0 0.0
    %1166 = vmatprep.subr.mxu0 0.0
    %1167 = vmatpush1.msra.mxu0 0.0
    %1168 = vmatprep.subr.mxu0 0.0
    %1169 = vmatpush1.msra.mxu0 0.0
    %1170 = vmatprep.subr.mxu0 0.0
    %1171 = vmatpush1.msra.mxu0 0.0
    %1172 = vmatprep.subr.mxu0 0.0
    %1173 = vmatpush1.msra.mxu0 0.0
    %1174 = vmatprep.subr.mxu0 0.0
    %1175 = vmatpush1.msra.mxu0 0.0
    %1176 = vmatprep.subr.mxu0 0.0
    %1177 = vmatpush1.msra.mxu0 0.0
    %1178 = vmatprep.subr.mxu0 0.0
    %1179 = vmatpush1.msra.mxu0 0.0
    %1180 = vmatprep.subr.mxu0 0.0
    %1181 = vmatpush1.msra.mxu0 0.0
    %1182 = vmatprep.subr.mxu0 0.0
    %1183 = vmatpush1.msra.mxu0 0.0
    %1184 = vmatprep.subr.mxu0 0.0
    %1185 = vmatpush1.msra.mxu0 0.0
    %1186 = vmatprep.subr.mxu0 0.0
    %1187 = vmatpush1.msra.mxu0 0.0
    %1188 = vmatprep.subr.mxu0 0.0
    %1189 = vmatpush1.msra.mxu0 0.0
    %1190 = vmatprep.subr.mxu0 0.0
    %1191 = vmatpush1.msra.mxu0 0.0
    %1192 = vmatprep.mubr.f32.mxu0 0.0
    %1193 = vmatmul.mubr.f32.gmra.mrb[0].mxu0 %v1126
    %v1194 = vpop.f32.mrb[0].mxu0
    %v1195 = vadd.f32 0.0, %v1194
    %v1196 = vpop.f32.mrb[0].mxu0
    %v1197 = vadd.f32 0.0, %v1196
    %1198 = vdwg.mxu0
    %1199 = vmatprep.subr.mxu0 0.0
    %1200 = vmatpush1.msra.mxu0 %v238
    %1201 = vmatprep.subr.mxu0 0.0
    %1202 = vmatpush1.msra.mxu0 %v241
    %1203 = vmatprep.subr.mxu0 0.0
    %1204 = vmatpush1.msra.mxu0 %v244
    %1205 = vmatprep.subr.mxu0 0.0
    %1206 = vmatpush1.msra.mxu0 %v247
    %1207 = vmatprep.subr.mxu0 0.0
    %1208 = vmatpush1.msra.mxu0 %v250
    %1209 = vmatprep.subr.mxu0 0.0
    %1210 = vmatpush1.msra.mxu0 %v253
    %1211 = vmatprep.subr.mxu0 0.0
    %1212 = vmatpush1.msra.mxu0 %v256
    %1213 = vmatprep.subr.mxu0 0.0
    %1214 = vmatpush1.msra.mxu0 %v259
    %1215 = vmatprep.subr.mxu0 0.0
    %1216 = vmatpush1.msra.mxu0 %v262
    %1217 = vmatprep.subr.mxu0 0.0
    %1218 = vmatpush1.msra.mxu0 %v265
    %1219 = vmatprep.subr.mxu0 0.0
    %1220 = vmatpush1.msra.mxu0 %v268
    %1221 = vmatprep.subr.mxu0 0.0
    %1222 = vmatpush1.msra.mxu0 %v271
    %1223 = vmatprep.subr.mxu0 0.0
    %1224 = vmatpush1.msra.mxu0 %v274
    %1225 = vmatprep.subr.mxu0 0.0
    %1226 = vmatpush1.msra.mxu0 %v277
    %1227 = vmatprep.subr.mxu0 0.0
    %1228 = vmatpush1.msra.mxu0 %v280
    %1229 = vmatprep.subr.mxu0 0.0
    %1230 = vmatpush1.msra.mxu0 %v283
    %1231 = vmatprep.subr.mxu0 0.0
    %1232 = vmatpush1.msra.mxu0 0.0
    %1233 = vmatprep.subr.mxu0 0.0
    %1234 = vmatpush1.msra.mxu0 0.0
    %1235 = vmatprep.subr.mxu0 0.0
    %1236 = vmatpush1.msra.mxu0 0.0
    %1237 = vmatprep.subr.mxu0 0.0
    %1238 = vmatpush1.msra.mxu0 0.0
    %1239 = vmatprep.subr.mxu0 0.0
    %1240 = vmatpush1.msra.mxu0 0.0
    %1241 = vmatprep.subr.mxu0 0.0
    %1242 = vmatpush1.msra.mxu0 0.0
    %1243 = vmatprep.subr.mxu0 0.0
    %1244 = vmatpush1.msra.mxu0 0.0
    %1245 = vmatprep.subr.mxu0 0.0
    %1246 = vmatpush1.msra.mxu0 0.0
    %1247 = vmatprep.subr.mxu0 0.0
    %1248 = vmatpush1.msra.mxu0 0.0
    %1249 = vmatprep.subr.mxu0 0.0
    %1250 = vmatpush1.msra.mxu0 0.0
    %1251 = vmatprep.subr.mxu0 0.0
    %1252 = vmatpush1.msra.mxu0 0.0
    %1253 = vmatprep.subr.mxu0 0.0
    %1254 = vmatpush1.msra.mxu0 0.0
    %1255 = vmatprep.subr.mxu0 0.0
    %1256 = vmatpush1.msra.mxu0 0.0
    %1257 = vmatprep.subr.mxu0 0.0
    %1258 = vmatpush1.msra.mxu0 0.0
    %1259 = vmatprep.subr.mxu0 0.0
    %1260 = vmatpush1.msra.mxu0 0.0
    %1261 = vmatprep.subr.mxu0 0.0
    %1262 = vmatpush1.msra.mxu0 0.0
    %1263 = vmatprep.mubr.f32.mxu0 0.0
    %1264 = vmatmul.mubr.f32.gmra.mrb[0].mxu0 %v1126
    %v1265 = vpop.f32.mrb[0].mxu0
    %v1266 = vadd.f32 0.0, %v1265
    %v1267 = vpop.f32.mrb[0].mxu0
    %1268 = vdwg.mxu0
    %v1270 = vrot.slane %v1195, 4
    %v1271 = vrot.slane %v1195, 5
    %v1274 = vadd.f32 %v151, %v1270
    %v1275 = vadd.f32 %v157, %v1271
    %v1276 = vxor.u32 %v1274, 2147483648
    %v1277 = vxor.u32 %v1275, 2147483648
    %v1278 = vmul.f32 %v1276, 1.442695
    %v1279 = vpow.pop %v1278
    %v1280 = vmul.f32 %v1277, 1.442695
    %v1281 = vpow.pop %v1280
    %v1282 = vadd.f32 %v1279, 1.0
    %v1283 = vadd.f32 %v1281, 1.0
    %v1284 = vrcp.pop %v1282
    %v1285 = vmul.f32 1.0, %v1284
    %v1286 = vrcp.pop %v1283
    %v1287 = vmul.f32 1.0, %v1286
    %v1289 = vrot.slane %v1197, 4
    %v1290 = vrot.slane %v1197, 5
    %v1293 = vadd.f32 %v153, %v1289
    %v1294 = vadd.f32 %v159, %v1290
    %v1295 = vxor.u32 %v1293, 2147483648
    %v1296 = vxor.u32 %v1294, 2147483648
    %v1297 = vmul.f32 %v1295, 1.442695
    %v1298 = vpow.pop %v1297
    %v1299 = vmul.f32 %v1296, 1.442695
    %v1300 = vpow.pop %v1299
    %v1301 = vadd.f32 %v1298, 1.0
    %v1302 = vadd.f32 %v1300, 1.0
    %v1303 = vrcp.pop %v1301
    %v1304 = vmul.f32 1.0, %v1303
    %v1305 = vrcp.pop %v1302
    %v1306 = vmul.f32 1.0, %v1305
    %v1307 = vadd.f32 %v1266, %v467
    %v1309 = vrot.slane %v1307, 4
    %v1310 = vrot.slane %v1307, 5
    %v1313 = vmul.f32 %v1285, %v1309
    %v1314 = vmul.f32 %v1287, %v1310
    %v1315 = vadd.f32 %v228, %v1313
    %v1316 = vadd.f32 %v233, %v1314
    %v1317 = vtanh.pop %v1315
    %v1318 = vtanh.pop %v1316
    %v1319 = vsub.f32 1.0, %v1304
    %v1320 = vsub.f32 1.0, %v1306
    %v1321 = vmul.f32 %v1319, %v1317
    %v1322 = vmul.f32 %v1320, %v1318
    %v1323 = vrot.slane %v1118, 7
    %v1324 = vrot.slane %v1119, 7
    %v1327 = vmul.f32 %v1304, %v1323
    %v1328 = vmul.f32 %v1306, %v1324
    %v1329 = vadd.f32 %v1321, %v1327
    %v1330 = vadd.f32 %v1322, %v1328
    %1331 = vst [vmem:[#allocation3] sm:$0x10] %v1329
    %1332 = vst [vmem:[#allocation3 + $0x8] sm:$0x10] %v1330
    %v1335 = vrot.slane %v1329, 4
    %v1336 = vrot.slane %v1330, 3
    %v1337 = vsel %vm497, %v1336, %v1335
    %1339 = vmatprep.subr.mxu0 %v237
    %1340 = vmatpush1.msra.mxu0 %v236
    %1341 = vmatprep.subr.mxu0 %v240
    %1342 = vmatpush1.msra.mxu0 %v239
    %1343 = vmatprep.subr.mxu0 %v243
    %1344 = vmatpush1.msra.mxu0 %v242
    %1345 = vmatprep.subr.mxu0 %v246
    %1346 = vmatpush1.msra.mxu0 %v245
    %1347 = vmatprep.subr.mxu0 %v249
    %1348 = vmatpush1.msra.mxu0 %v248
    %1349 = vmatprep.subr.mxu0 %v252
    %1350 = vmatpush1.msra.mxu0 %v251
    %1351 = vmatprep.subr.mxu0 %v255
    %1352 = vmatpush1.msra.mxu0 %v254
    %1353 = vmatprep.subr.mxu0 %v258
    %1354 = vmatpush1.msra.mxu0 %v257
    %1355 = vmatprep.subr.mxu0 %v261
    %1356 = vmatpush1.msra.mxu0 %v260
    %1357 = vmatprep.subr.mxu0 %v264
    %1358 = vmatpush1.msra.mxu0 %v263
    %1359 = vmatprep.subr.mxu0 %v267
    %1360 = vmatpush1.msra.mxu0 %v266
    %1361 = vmatprep.subr.mxu0 %v270
    %1362 = vmatpush1.msra.mxu0 %v269
    %1363 = vmatprep.subr.mxu0 %v273
    %1364 = vmatpush1.msra.mxu0 %v272
    %1365 = vmatprep.subr.mxu0 %v276
    %1366 = vmatpush1.msra.mxu0 %v275
    %1367 = vmatprep.subr.mxu0 %v279
    %1368 = vmatpush1.msra.mxu0 %v278
    %1369 = vmatprep.subr.mxu0 %v282
    %1370 = vmatpush1.msra.mxu0 %v281
    %1371 = vmatprep.subr.mxu0 0.0
    %1372 = vmatpush1.msra.mxu0 0.0
    %1373 = vmatprep.subr.mxu0 0.0
    %1374 = vmatpush1.msra.mxu0 0.0
    %1375 = vmatprep.subr.mxu0 0.0
    %1376 = vmatpush1.msra.mxu0 0.0
    %1377 = vmatprep.subr.mxu0 0.0
    %1378 = vmatpush1.msra.mxu0 0.0
    %1379 = vmatprep.subr.mxu0 0.0
    %1380 = vmatpush1.msra.mxu0 0.0
    %1381 = vmatprep.subr.mxu0 0.0
    %1382 = vmatpush1.msra.mxu0 0.0
    %1383 = vmatprep.subr.mxu0 0.0
    %1384 = vmatpush1.msra.mxu0 0.0
    %1385 = vmatprep.subr.mxu0 0.0
    %1386 = vmatpush1.msra.mxu0 0.0
    %1387 = vmatprep.subr.mxu0 0.0
    %1388 = vmatpush1.msra.mxu0 0.0
    %1389 = vmatprep.subr.mxu0 0.0
    %1390 = vmatpush1.msra.mxu0 0.0
    %1391 = vmatprep.subr.mxu0 0.0
    %1392 = vmatpush1.msra.mxu0 0.0
    %1393 = vmatprep.subr.mxu0 0.0
    %1394 = vmatpush1.msra.mxu0 0.0
    %1395 = vmatprep.subr.mxu0 0.0
    %1396 = vmatpush1.msra.mxu0 0.0
    %1397 = vmatprep.subr.mxu0 0.0
    %1398 = vmatpush1.msra.mxu0 0.0
    %1399 = vmatprep.subr.mxu0 0.0
    %1400 = vmatpush1.msra.mxu0 0.0
    %1401 = vmatprep.subr.mxu0 0.0
    %1402 = vmatpush1.msra.mxu0 0.0
    %1403 = vmatprep.mubr.f32.mxu0 0.0
    %1404 = vmatmul.mubr.f32.gmra.mrb[0].mxu0 %v1337
    %v1405 = vpop.f32.mrb[0].mxu0
    %v1406 = vadd.f32 0.0, %v1405
    %v1407 = vpop.f32.mrb[0].mxu0
    %v1408 = vadd.f32 0.0, %v1407
    %1409 = vdwg.mxu0
    %1410 = vmatprep.subr.mxu0 0.0
    %1411 = vmatpush1.msra.mxu0 %v238
    %1412 = vmatprep.subr.mxu0 0.0
    %1413 = vmatpush1.msra.mxu0 %v241
    %1414 = vmatprep.subr.mxu0 0.0
    %1415 = vmatpush1.msra.mxu0 %v244
    %1416 = vmatprep.subr.mxu0 0.0
    %1417 = vmatpush1.msra.mxu0 %v247
    %1418 = vmatprep.subr.mxu0 0.0
    %1419 = vmatpush1.msra.mxu0 %v250
    %1420 = vmatprep.subr.mxu0 0.0
    %1421 = vmatpush1.msra.mxu0 %v253
    %1422 = vmatprep.subr.mxu0 0.0
    %1423 = vmatpush1.msra.mxu0 %v256
    %1424 = vmatprep.subr.mxu0 0.0
    %1425 = vmatpush1.msra.mxu0 %v259
    %1426 = vmatprep.subr.mxu0 0.0
    %1427 = vmatpush1.msra.mxu0 %v262
    %1428 = vmatprep.subr.mxu0 0.0
    %1429 = vmatpush1.msra.mxu0 %v265
    %1430 = vmatprep.subr.mxu0 0.0
    %1431 = vmatpush1.msra.mxu0 %v268
    %1432 = vmatprep.subr.mxu0 0.0
    %1433 = vmatpush1.msra.mxu0 %v271
    %1434 = vmatprep.subr.mxu0 0.0
    %1435 = vmatpush1.msra.mxu0 %v274
    %1436 = vmatprep.subr.mxu0 0.0
    %1437 = vmatpush1.msra.mxu0 %v277
    %1438 = vmatprep.subr.mxu0 0.0
    %1439 = vmatpush1.msra.mxu0 %v280
    %1440 = vmatprep.subr.mxu0 0.0
    %1441 = vmatpush1.msra.mxu0 %v283
    %1442 = vmatprep.subr.mxu0 0.0
    %1443 = vmatpush1.msra.mxu0 0.0
    %1444 = vmatprep.subr.mxu0 0.0
    %1445 = vmatpush1.msra.mxu0 0.0
    %1446 = vmatprep.subr.mxu0 0.0
    %1447 = vmatpush1.msra.mxu0 0.0
    %1448 = vmatprep.subr.mxu0 0.0
    %1449 = vmatpush1.msra.mxu0 0.0
    %1450 = vmatprep.subr.mxu0 0.0
    %1451 = vmatpush1.msra.mxu0 0.0
    %1452 = vmatprep.subr.mxu0 0.0
    %1453 = vmatpush1.msra.mxu0 0.0
    %1454 = vmatprep.subr.mxu0 0.0
    %1455 = vmatpush1.msra.mxu0 0.0
    %1456 = vmatprep.subr.mxu0 0.0
    %1457 = vmatpush1.msra.mxu0 0.0
    %1458 = vmatprep.subr.mxu0 0.0
    %1459 = vmatpush1.msra.mxu0 0.0
    %1460 = vmatprep.subr.mxu0 0.0
    %1461 = vmatpush1.msra.mxu0 0.0
    %1462 = vmatprep.subr.mxu0 0.0
    %1463 = vmatpush1.msra.mxu0 0.0
    %1464 = vmatprep.subr.mxu0 0.0
    %1465 = vmatpush1.msra.mxu0 0.0
    %1466 = vmatprep.subr.mxu0 0.0
    %1467 = vmatpush1.msra.mxu0 0.0
    %1468 = vmatprep.subr.mxu0 0.0
    %1469 = vmatpush1.msra.mxu0 0.0
    %1470 = vmatprep.subr.mxu0 0.0
    %1471 = vmatpush1.msra.mxu0 0.0
    %1472 = vmatprep.subr.mxu0 0.0
    %1473 = vmatpush1.msra.mxu0 0.0
    %1474 = vmatprep.mubr.f32.mxu0 0.0
    %1475 = vmatmul.mubr.f32.gmra.mrb[0].mxu0 %v1337
    %v1476 = vpop.f32.mrb[0].mxu0
    %v1477 = vadd.f32 0.0, %v1476
    %v1478 = vpop.f32.mrb[0].mxu0
    %1479 = vdwg.mxu0
    %v1481 = vrot.slane %v1406, 3
    %v1482 = vrot.slane %v1406, 4
    %v1485 = vadd.f32 %v151, %v1481
    %v1486 = vadd.f32 %v157, %v1482
    %v1487 = vxor.u32 %v1485, 2147483648
    %v1488 = vxor.u32 %v1486, 2147483648
    %v1489 = vmul.f32 %v1487, 1.442695
    %v1490 = vpow.pop %v1489
    %v1491 = vmul.f32 %v1488, 1.442695
    %v1492 = vpow.pop %v1491
    %v1493 = vadd.f32 %v1490, 1.0
    %v1494 = vadd.f32 %v1492, 1.0
    %v1495 = vrcp.pop %v1493
    %v1496 = vmul.f32 1.0, %v1495
    %v1497 = vrcp.pop %v1494
    %v1498 = vmul.f32 1.0, %v1497
    %v1500 = vrot.slane %v1408, 3
    %v1501 = vrot.slane %v1408, 4
    %v1504 = vadd.f32 %v153, %v1500
    %v1505 = vadd.f32 %v159, %v1501
    %v1506 = vxor.u32 %v1504, 2147483648
    %v1507 = vxor.u32 %v1505, 2147483648
    %v1508 = vmul.f32 %v1506, 1.442695
    %v1509 = vpow.pop %v1508
    %v1510 = vmul.f32 %v1507, 1.442695
    %v1511 = vpow.pop %v1510
    %v1512 = vadd.f32 %v1509, 1.0
    %v1513 = vadd.f32 %v1511, 1.0
    %v1514 = vrcp.pop %v1512
    %v1515 = vmul.f32 1.0, %v1514
    %v1516 = vrcp.pop %v1513
    %v1517 = vmul.f32 1.0, %v1516
    %v1518 = vadd.f32 %v1477, %v467
    %v1520 = vrot.slane %v1518, 3
    %v1521 = vrot.slane %v1518, 4
    %v1524 = vmul.f32 %v1496, %v1520
    %v1525 = vmul.f32 %v1498, %v1521
    %v1526 = vadd.f32 %v228, %v1524
    %v1527 = vadd.f32 %v233, %v1525
    %v1528 = vtanh.pop %v1526
    %v1529 = vtanh.pop %v1527
    %v1530 = vsub.f32 1.0, %v1515
    %v1531 = vsub.f32 1.0, %v1517
    %v1532 = vmul.f32 %v1530, %v1528
    %v1533 = vmul.f32 %v1531, %v1529
    %v1534 = vrot.slane %v1329, 7
    %v1535 = vrot.slane %v1330, 7
    %v1538 = vmul.f32 %v1515, %v1534
    %v1539 = vmul.f32 %v1517, %v1535
    %v1540 = vadd.f32 %v1532, %v1538
    %v1541 = vadd.f32 %v1533, %v1539
    %1542 = vst [vmem:[#allocation3] sm:$0x20] %v1540
    %1543 = vst [vmem:[#allocation3 + $0x8] sm:$0x20] %v1541
    %v1546 = vrot.slane %v1540, 5
    %v1547 = vrot.slane %v1541, 4
    %v1548 = vsel %vm497, %v1547, %v1546
    %1550 = vmatprep.subr.mxu0 %v237
    %1551 = vmatpush1.msra.mxu0 %v236
    %1552 = vmatprep.subr.mxu0 %v240
    %1553 = vmatpush1.msra.mxu0 %v239
    %1554 = vmatprep.subr.mxu0 %v243
    %1555 = vmatpush1.msra.mxu0 %v242
    %1556 = vmatprep.subr.mxu0 %v246
    %1557 = vmatpush1.msra.mxu0 %v245
    %1558 = vmatprep.subr.mxu0 %v249
    %1559 = vmatpush1.msra.mxu0 %v248
    %1560 = vmatprep.subr.mxu0 %v252
    %1561 = vmatpush1.msra.mxu0 %v251
    %1562 = vmatprep.subr.mxu0 %v255
    %1563 = vmatpush1.msra.mxu0 %v254
    %1564 = vmatprep.subr.mxu0 %v258
    %1565 = vmatpush1.msra.mxu0 %v257
    %1566 = vmatprep.subr.mxu0 %v261
    %1567 = vmatpush1.msra.mxu0 %v260
    %1568 = vmatprep.subr.mxu0 %v264
    %1569 = vmatpush1.msra.mxu0 %v263
    %1570 = vmatprep.subr.mxu0 %v267
    %1571 = vmatpush1.msra.mxu0 %v266
    %1572 = vmatprep.subr.mxu0 %v270
    %1573 = vmatpush1.msra.mxu0 %v269
    %1574 = vmatprep.subr.mxu0 %v273
    %1575 = vmatpush1.msra.mxu0 %v272
    %1576 = vmatprep.subr.mxu0 %v276
    %1577 = vmatpush1.msra.mxu0 %v275
    %1578 = vmatprep.subr.mxu0 %v279
    %1579 = vmatpush1.msra.mxu0 %v278
    %1580 = vmatprep.subr.mxu0 %v282
    %1581 = vmatpush1.msra.mxu0 %v281
    %1582 = vmatprep.subr.mxu0 0.0
    %1583 = vmatpush1.msra.mxu0 0.0
    %1584 = vmatprep.subr.mxu0 0.0
    %1585 = vmatpush1.msra.mxu0 0.0
    %1586 = vmatprep.subr.mxu0 0.0
    %1587 = vmatpush1.msra.mxu0 0.0
    %1588 = vmatprep.subr.mxu0 0.0
    %1589 = vmatpush1.msra.mxu0 0.0
    %1590 = vmatprep.subr.mxu0 0.0
    %1591 = vmatpush1.msra.mxu0 0.0
    %1592 = vmatprep.subr.mxu0 0.0
    %1593 = vmatpush1.msra.mxu0 0.0
    %1594 = vmatprep.subr.mxu0 0.0
    %1595 = vmatpush1.msra.mxu0 0.0
    %1596 = vmatprep.subr.mxu0 0.0
    %1597 = vmatpush1.msra.mxu0 0.0
    %1598 = vmatprep.subr.mxu0 0.0
    %1599 = vmatpush1.msra.mxu0 0.0
    %1600 = vmatprep.subr.mxu0 0.0
    %1601 = vmatpush1.msra.mxu0 0.0
    %1602 = vmatprep.subr.mxu0 0.0
    %1603 = vmatpush1.msra.mxu0 0.0
    %1604 = vmatprep.subr.mxu0 0.0
    %1605 = vmatpush1.msra.mxu0 0.0
    %1606 = vmatprep.subr.mxu0 0.0
    %1607 = vmatpush1.msra.mxu0 0.0
    %1608 = vmatprep.subr.mxu0 0.0
    %1609 = vmatpush1.msra.mxu0 0.0
    %1610 = vmatprep.subr.mxu0 0.0
    %1611 = vmatpush1.msra.mxu0 0.0
    %1612 = vmatprep.subr.mxu0 0.0
    %1613 = vmatpush1.msra.mxu0 0.0
    %1614 = vmatprep.mubr.f32.mxu0 0.0
    %1615 = vmatmul.mubr.f32.gmra.mrb[0].mxu0 %v1548
    %v1616 = vpop.f32.mrb[0].mxu0
    %v1617 = vadd.f32 0.0, %v1616
    %v1618 = vpop.f32.mrb[0].mxu0
    %v1619 = vadd.f32 0.0, %v1618
    %1620 = vdwg.mxu0
    %1621 = vmatprep.subr.mxu0 0.0
    %1622 = vmatpush1.msra.mxu0 %v238
    %1623 = vmatprep.subr.mxu0 0.0
    %1624 = vmatpush1.msra.mxu0 %v241
    %1625 = vmatprep.subr.mxu0 0.0
    %1626 = vmatpush1.msra.mxu0 %v244
    %1627 = vmatprep.subr.mxu0 0.0
    %1628 = vmatpush1.msra.mxu0 %v247
    %1629 = vmatprep.subr.mxu0 0.0
    %1630 = vmatpush1.msra.mxu0 %v250
    %1631 = vmatprep.subr.mxu0 0.0
    %1632 = vmatpush1.msra.mxu0 %v253
    %1633 = vmatprep.subr.mxu0 0.0
    %1634 = vmatpush1.msra.mxu0 %v256
    %1635 = vmatprep.subr.mxu0 0.0
    %1636 = vmatpush1.msra.mxu0 %v259
    %1637 = vmatprep.subr.mxu0 0.0
    %1638 = vmatpush1.msra.mxu0 %v262
    %1639 = vmatprep.subr.mxu0 0.0
    %1640 = vmatpush1.msra.mxu0 %v265
    %1641 = vmatprep.subr.mxu0 0.0
    %1642 = vmatpush1.msra.mxu0 %v268
    %1643 = vmatprep.subr.mxu0 0.0
    %1644 = vmatpush1.msra.mxu0 %v271
    %1645 = vmatprep.subr.mxu0 0.0
    %1646 = vmatpush1.msra.mxu0 %v274
    %1647 = vmatprep.subr.mxu0 0.0
    %1648 = vmatpush1.msra.mxu0 %v277
    %1649 = vmatprep.subr.mxu0 0.0
    %1650 = vmatpush1.msra.mxu0 %v280
    %1651 = vmatprep.subr.mxu0 0.0
    %1652 = vmatpush1.msra.mxu0 %v283
    %1653 = vmatprep.subr.mxu0 0.0
    %1654 = vmatpush1.msra.mxu0 0.0
    %1655 = vmatprep.subr.mxu0 0.0
    %1656 = vmatpush1.msra.mxu0 0.0
    %1657 = vmatprep.subr.mxu0 0.0
    %1658 = vmatpush1.msra.mxu0 0.0
    %1659 = vmatprep.subr.mxu0 0.0
    %1660 = vmatpush1.msra.mxu0 0.0
    %1661 = vmatprep.subr.mxu0 0.0
    %1662 = vmatpush1.msra.mxu0 0.0
    %1663 = vmatprep.subr.mxu0 0.0
    %1664 = vmatpush1.msra.mxu0 0.0
    %1665 = vmatprep.subr.mxu0 0.0
    %1666 = vmatpush1.msra.mxu0 0.0
    %1667 = vmatprep.subr.mxu0 0.0
    %1668 = vmatpush1.msra.mxu0 0.0
    %1669 = vmatprep.subr.mxu0 0.0
    %1670 = vmatpush1.msra.mxu0 0.0
    %1671 = vmatprep.subr.mxu0 0.0
    %1672 = vmatpush1.msra.mxu0 0.0
    %1673 = vmatprep.subr.mxu0 0.0
    %1674 = vmatpush1.msra.mxu0 0.0
    %1675 = vmatprep.subr.mxu0 0.0
    %1676 = vmatpush1.msra.mxu0 0.0
    %1677 = vmatprep.subr.mxu0 0.0
    %1678 = vmatpush1.msra.mxu0 0.0
    %1679 = vmatprep.subr.mxu0 0.0
    %1680 = vmatpush1.msra.mxu0 0.0
    %1681 = vmatprep.subr.mxu0 0.0
    %1682 = vmatpush1.msra.mxu0 0.0
    %1683 = vmatprep.subr.mxu0 0.0
    %1684 = vmatpush1.msra.mxu0 0.0
    %1685 = vmatprep.mubr.f32.mxu0 0.0
    %1686 = vmatmul.mubr.f32.gmra.mrb[0].mxu0 %v1548
    %v1687 = vpop.f32.mrb[0].mxu0
    %v1688 = vadd.f32 0.0, %v1687
    %v1689 = vpop.f32.mrb[0].mxu0
    %1690 = vdwg.mxu0
    %v1692 = vrot.slane %v1617, 2
    %v1693 = vrot.slane %v1617, 3
    %v1696 = vadd.f32 %v151, %v1692
    %v1697 = vadd.f32 %v157, %v1693
    %v1698 = vxor.u32 %v1696, 2147483648
    %v1699 = vxor.u32 %v1697, 2147483648
    %v1700 = vmul.f32 %v1698, 1.442695
    %v1701 = vpow.pop %v1700
    %v1702 = vmul.f32 %v1699, 1.442695
    %v1703 = vpow.pop %v1702
    %v1704 = vadd.f32 %v1701, 1.0
    %v1705 = vadd.f32 %v1703, 1.0
    %v1706 = vrcp.pop %v1704
    %v1707 = vmul.f32 1.0, %v1706
    %v1708 = vrcp.pop %v1705
    %v1709 = vmul.f32 1.0, %v1708
    %v1711 = vrot.slane %v1619, 2
    %v1712 = vrot.slane %v1619, 3
    %v1715 = vadd.f32 %v153, %v1711
    %v1716 = vadd.f32 %v159, %v1712
    %v1717 = vxor.u32 %v1715, 2147483648
    %v1718 = vxor.u32 %v1716, 2147483648
    %v1719 = vmul.f32 %v1717, 1.442695
    %v1720 = vpow.pop %v1719
    %v1721 = vmul.f32 %v1718, 1.442695
    %v1722 = vpow.pop %v1721
    %v1723 = vadd.f32 %v1720, 1.0
    %v1724 = vadd.f32 %v1722, 1.0
    %v1725 = vrcp.pop %v1723
    %v1726 = vmul.f32 1.0, %v1725
    %v1727 = vrcp.pop %v1724
    %v1728 = vmul.f32 1.0, %v1727
    %v1729 = vadd.f32 %v1688, %v467
    %v1731 = vrot.slane %v1729, 2
    %v1732 = vrot.slane %v1729, 3
    %v1735 = vmul.f32 %v1707, %v1731
    %v1736 = vmul.f32 %v1709, %v1732
    %v1737 = vadd.f32 %v228, %v1735
    %v1738 = vadd.f32 %v233, %v1736
    %v1739 = vtanh.pop %v1737
    %v1740 = vtanh.pop %v1738
    %v1741 = vsub.f32 1.0, %v1726
    %v1742 = vsub.f32 1.0, %v1728
    %v1743 = vmul.f32 %v1741, %v1739
    %v1744 = vmul.f32 %v1742, %v1740
    %v1745 = vrot.slane %v1540, 7
    %v1746 = vrot.slane %v1541, 7
    %v1749 = vmul.f32 %v1726, %v1745
    %v1750 = vmul.f32 %v1728, %v1746
    %v1751 = vadd.f32 %v1743, %v1749
    %v1752 = vadd.f32 %v1744, %v1750
    %1753 = vst [vmem:[#allocation3] sm:$0x40] %v1751
    %1754 = vst [vmem:[#allocation3 + $0x8] sm:$0x40] %v1752
    %v1757 = vrot.slane %v1751, 6
    %v1758 = vrot.slane %v1752, 5
    %v1759 = vsel %vm497, %v1758, %v1757
    %1761 = vmatprep.subr.mxu0 %v237
    %1762 = vmatpush1.msra.mxu0 %v236
    %1763 = vmatprep.subr.mxu0 %v240
    %1764 = vmatpush1.msra.mxu0 %v239
    %1765 = vmatprep.subr.mxu0 %v243
    %1766 = vmatpush1.msra.mxu0 %v242
    %1767 = vmatprep.subr.mxu0 %v246
    %1768 = vmatpush1.msra.mxu0 %v245
    %1769 = vmatprep.subr.mxu0 %v249
    %1770 = vmatpush1.msra.mxu0 %v248
    %1771 = vmatprep.subr.mxu0 %v252
    %1772 = vmatpush1.msra.mxu0 %v251
    %1773 = vmatprep.subr.mxu0 %v255
    %1774 = vmatpush1.msra.mxu0 %v254
    %1775 = vmatprep.subr.mxu0 %v258
    %1776 = vmatpush1.msra.mxu0 %v257
    %1777 = vmatprep.subr.mxu0 %v261
    %1778 = vmatpush1.msra.mxu0 %v260
    %1779 = vmatprep.subr.mxu0 %v264
    %1780 = vmatpush1.msra.mxu0 %v263
    %1781 = vmatprep.subr.mxu0 %v267
    %1782 = vmatpush1.msra.mxu0 %v266
    %1783 = vmatprep.subr.mxu0 %v270
    %1784 = vmatpush1.msra.mxu0 %v269
    %1785 = vmatprep.subr.mxu0 %v273
    %1786 = vmatpush1.msra.mxu0 %v272
    %1787 = vmatprep.subr.mxu0 %v276
    %1788 = vmatpush1.msra.mxu0 %v275
    %1789 = vmatprep.subr.mxu0 %v279
    %1790 = vmatpush1.msra.mxu0 %v278
    %1791 = vmatprep.subr.mxu0 %v282
    %1792 = vmatpush1.msra.mxu0 %v281
    %1793 = vmatprep.subr.mxu0 0.0
    %1794 = vmatpush1.msra.mxu0 0.0
    %1795 = vmatprep.subr.mxu0 0.0
    %1796 = vmatpush1.msra.mxu0 0.0
    %1797 = vmatprep.subr.mxu0 0.0
    %1798 = vmatpush1.msra.mxu0 0.0
    %1799 = vmatprep.subr.mxu0 0.0
    %1800 = vmatpush1.msra.mxu0 0.0
    %1801 = vmatprep.subr.mxu0 0.0
    %1802 = vmatpush1.msra.mxu0 0.0
    %1803 = vmatprep.subr.mxu0 0.0
    %1804 = vmatpush1.msra.mxu0 0.0
    %1805 = vmatprep.subr.mxu0 0.0
    %1806 = vmatpush1.msra.mxu0 0.0
    %1807 = vmatprep.subr.mxu0 0.0
    %1808 = vmatpush1.msra.mxu0 0.0
    %1809 = vmatprep.subr.mxu0 0.0
    %1810 = vmatpush1.msra.mxu0 0.0
    %1811 = vmatprep.subr.mxu0 0.0
    %1812 = vmatpush1.msra.mxu0 0.0
    %1813 = vmatprep.subr.mxu0 0.0
    %1814 = vmatpush1.msra.mxu0 0.0
    %1815 = vmatprep.subr.mxu0 0.0
    %1816 = vmatpush1.msra.mxu0 0.0
    %1817 = vmatprep.subr.mxu0 0.0
    %1818 = vmatpush1.msra.mxu0 0.0
    %1819 = vmatprep.subr.mxu0 0.0
    %1820 = vmatpush1.msra.mxu0 0.0
    %1821 = vmatprep.subr.mxu0 0.0
    %1822 = vmatpush1.msra.mxu0 0.0
    %1823 = vmatprep.subr.mxu0 0.0
    %1824 = vmatpush1.msra.mxu0 0.0
    %1825 = vmatprep.mubr.f32.mxu0 0.0
    %1826 = vmatmul.mubr.f32.gmra.mrb[0].mxu0 %v1759
    %v1827 = vpop.f32.mrb[0].mxu0
    %v1828 = vadd.f32 0.0, %v1827
    %v1829 = vpop.f32.mrb[0].mxu0
    %v1830 = vadd.f32 0.0, %v1829
    %1831 = vdwg.mxu0
    %1832 = vmatprep.subr.mxu0 0.0
    %1833 = vmatpush1.msra.mxu0 %v238
    %1834 = vmatprep.subr.mxu0 0.0
    %1835 = vmatpush1.msra.mxu0 %v241
    %1836 = vmatprep.subr.mxu0 0.0
    %1837 = vmatpush1.msra.mxu0 %v244
    %1838 = vmatprep.subr.mxu0 0.0
    %1839 = vmatpush1.msra.mxu0 %v247
    %1840 = vmatprep.subr.mxu0 0.0
    %1841 = vmatpush1.msra.mxu0 %v250
    %1842 = vmatprep.subr.mxu0 0.0
    %1843 = vmatpush1.msra.mxu0 %v253
    %1844 = vmatprep.subr.mxu0 0.0
    %1845 = vmatpush1.msra.mxu0 %v256
    %1846 = vmatprep.subr.mxu0 0.0
    %1847 = vmatpush1.msra.mxu0 %v259
    %1848 = vmatprep.subr.mxu0 0.0
    %1849 = vmatpush1.msra.mxu0 %v262
    %1850 = vmatprep.subr.mxu0 0.0
    %1851 = vmatpush1.msra.mxu0 %v265
    %1852 = vmatprep.subr.mxu0 0.0
    %1853 = vmatpush1.msra.mxu0 %v268
    %1854 = vmatprep.subr.mxu0 0.0
    %1855 = vmatpush1.msra.mxu0 %v271
    %1856 = vmatprep.subr.mxu0 0.0
    %1857 = vmatpush1.msra.mxu0 %v274
    %1858 = vmatprep.subr.mxu0 0.0
    %1859 = vmatpush1.msra.mxu0 %v277
    %1860 = vmatprep.subr.mxu0 0.0
    %1861 = vmatpush1.msra.mxu0 %v280
    %1862 = vmatprep.subr.mxu0 0.0
    %1863 = vmatpush1.msra.mxu0 %v283
    %1864 = vmatprep.subr.mxu0 0.0
    %1865 = vmatpush1.msra.mxu0 0.0
    %1866 = vmatprep.subr.mxu0 0.0
    %1867 = vmatpush1.msra.mxu0 0.0
    %1868 = vmatprep.subr.mxu0 0.0
    %1869 = vmatpush1.msra.mxu0 0.0
    %1870 = vmatprep.subr.mxu0 0.0
    %1871 = vmatpush1.msra.mxu0 0.0
    %1872 = vmatprep.subr.mxu0 0.0
    %1873 = vmatpush1.msra.mxu0 0.0
    %1874 = vmatprep.subr.mxu0 0.0
    %1875 = vmatpush1.msra.mxu0 0.0
    %1876 = vmatprep.subr.mxu0 0.0
    %1877 = vmatpush1.msra.mxu0 0.0
    %1878 = vmatprep.subr.mxu0 0.0
    %1879 = vmatpush1.msra.mxu0 0.0
    %1880 = vmatprep.subr.mxu0 0.0
    %1881 = vmatpush1.msra.mxu0 0.0
    %1882 = vmatprep.subr.mxu0 0.0
    %1883 = vmatpush1.msra.mxu0 0.0
    %1884 = vmatprep.subr.mxu0 0.0
    %1885 = vmatpush1.msra.mxu0 0.0
    %1886 = vmatprep.subr.mxu0 0.0
    %1887 = vmatpush1.msra.mxu0 0.0
    %1888 = vmatprep.subr.mxu0 0.0
    %1889 = vmatpush1.msra.mxu0 0.0
    %1890 = vmatprep.subr.mxu0 0.0
    %1891 = vmatpush1.msra.mxu0 0.0
    %1892 = vmatprep.subr.mxu0 0.0
    %1893 = vmatpush1.msra.mxu0 0.0
    %1894 = vmatprep.subr.mxu0 0.0
    %1895 = vmatpush1.msra.mxu0 0.0
    %1896 = vmatprep.mubr.f32.mxu0 0.0
    %1897 = vmatmul.mubr.f32.gmra.mrb[0].mxu0 %v1759
    %v1898 = vpop.f32.mrb[0].mxu0
    %v1899 = vadd.f32 0.0, %v1898
    %v1900 = vpop.f32.mrb[0].mxu0
    %1901 = vdwg.mxu0
    %v1903 = vrot.slane %v1828, 1
    %v1904 = vrot.slane %v1828, 2
    %v1907 = vadd.f32 %v151, %v1903
    %v1908 = vadd.f32 %v157, %v1904
    %v1909 = vxor.u32 %v1907, 2147483648
    %v1910 = vxor.u32 %v1908, 2147483648
    %v1911 = vmul.f32 %v1909, 1.442695
    %v1912 = vpow.pop %v1911
    %v1913 = vmul.f32 %v1910, 1.442695
    %v1914 = vpow.pop %v1913
    %v1915 = vadd.f32 %v1912, 1.0
    %v1916 = vadd.f32 %v1914, 1.0
    %v1917 = vrcp.pop %v1915
    %v1918 = vmul.f32 1.0, %v1917
    %v1919 = vrcp.pop %v1916
    %v1920 = vmul.f32 1.0, %v1919
    %v1922 = vrot.slane %v1830, 1
    %v1923 = vrot.slane %v1830, 2
    %v1926 = vadd.f32 %v153, %v1922
    %v1927 = vadd.f32 %v159, %v1923
    %v1928 = vxor.u32 %v1926, 2147483648
    %v1929 = vxor.u32 %v1927, 2147483648
    %v1930 = vmul.f32 %v1928, 1.442695
    %v1931 = vpow.pop %v1930
    %v1932 = vmul.f32 %v1929, 1.442695
    %v1933 = vpow.pop %v1932
    %v1934 = vadd.f32 %v1931, 1.0
    %v1935 = vadd.f32 %v1933, 1.0
    %v1936 = vrcp.pop %v1934
    %v1937 = vmul.f32 1.0, %v1936
    %v1938 = vrcp.pop %v1935
    %v1939 = vmul.f32 1.0, %v1938
    %v1940 = vadd.f32 %v1899, %v467
    %v1942 = vrot.slane %v1940, 1
    %v1943 = vrot.slane %v1940, 2
    %v1946 = vmul.f32 %v1918, %v1942
    %v1947 = vmul.f32 %v1920, %v1943
    %v1948 = vadd.f32 %v228, %v1946
    %v1949 = vadd.f32 %v233, %v1947
    %v1950 = vtanh.pop %v1948
    %v1951 = vtanh.pop %v1949
    %v1952 = vsub.f32 1.0, %v1937
    %v1953 = vsub.f32 1.0, %v1939
    %v1954 = vmul.f32 %v1952, %v1950
    %v1955 = vmul.f32 %v1953, %v1951
    %v1956 = vrot.slane %v1751, 7
    %v1957 = vrot.slane %v1752, 7
    %v1960 = vmul.f32 %v1937, %v1956
    %v1961 = vmul.f32 %v1939, %v1957
    %v1962 = vadd.f32 %v1954, %v1960
    %v1963 = vadd.f32 %v1955, %v1961
    %1964 = vst [vmem:[#allocation3] sm:$0x80] %v1962
    %1965 = vst [vmem:[#allocation3 + $0x8] sm:$0x80] %v1963
    %v1968 = vrot.slane %v1963, 7
    %1971 = vst [vmem:[#allocation2 - $0x7] sm:$0x80] %v1962
    %1972 = vst [vmem:[#allocation2 + $0x1] sm:$0x1] %v1968
    %v1973 = vld [vmem:[#allocation3] sm:$0xff]
    %v1974 = vld [vmem:[#allocation3 + $0x8] sm:$0xff]
    %v1975 = vld [vmem:[%s5] sm:$0xff]
    %v1976 = vld [vmem:[%s5 + $0x8] sm:$0xff]
    %v1977 = vld [vmem:[%s5 + $0x10] sm:$0xff]
    %v1978 = vld [vmem:[%s5 + $0x18] sm:$0xff]
    %v1979 = vld [vmem:[%s5 + $0x20] sm:$0xff]
    %v1980 = vld [vmem:[%s5 + $0x28] sm:$0xff]
    %v1981 = vld [vmem:[%s5 + $0x30] sm:$0xff]
    %v1982 = vld [vmem:[%s5 + $0x38] sm:$0xff]
    %v1983 = vld [vmem:[%s5 + $0x40] sm:$0xff]
    %v1984 = vld [vmem:[%s5 + $0x48] sm:$0xff]
    %v1985 = vld [vmem:[%s5 + $0x50] sm:$0xff]
    %v1986 = vld [vmem:[%s5 + $0x58] sm:$0xff]
    %v1987 = vld [vmem:[%s5 + $0x60] sm:$0xff]
    %v1988 = vld [vmem:[%s5 + $0x68] sm:$0xff]
    %v1989 = vld [vmem:[%s5 + $0x70] sm:$0xff]
    %v1990 = vld [vmem:[%s5 + $0x78] sm:$0xff]
    %v1991 = vld [vmem:[%s6] sm:$0x1]
    %v1993 = vlaneseq
    %v1994 = vshrl.u32 %v1993, 7
    %v1995 = vsub.s32 0, %v1994
    %v1996 = vrot.slane %v1991, %v1995
    %1998 = vmatprep.subr.mxu0 0.0
    %1999 = vmatpush1.msra.mxu0 %v1975
    %2000 = vmatprep.subr.mxu0 0.0
    %2001 = vmatpush1.msra.mxu0 %v1976
    %2002 = vmatprep.subr.mxu0 0.0
    %2003 = vmatpush1.msra.mxu0 %v1977
    %2004 = vmatprep.subr.mxu0 0.0
    %2005 = vmatpush1.msra.mxu0 %v1978
    %2006 = vmatprep.subr.mxu0 0.0
    %2007 = vmatpush1.msra.mxu0 %v1979
    %2008 = vmatprep.subr.mxu0 0.0
    %2009 = vmatpush1.msra.mxu0 %v1980
    %2010 = vmatprep.subr.mxu0 0.0
    %2011 = vmatpush1.msra.mxu0 %v1981
    %2012 = vmatprep.subr.mxu0 0.0
    %2013 = vmatpush1.msra.mxu0 %v1982
    %2014 = vmatprep.subr.mxu0 0.0
    %2015 = vmatpush1.msra.mxu0 %v1983
    %2016 = vmatprep.subr.mxu0 0.0
    %2017 = vmatpush1.msra.mxu0 %v1984
    %2018 = vmatprep.subr.mxu0 0.0
    %2019 = vmatpush1.msra.mxu0 %v1985
    %2020 = vmatprep.subr.mxu0 0.0
    %2021 = vmatpush1.msra.mxu0 %v1986
    %2022 = vmatprep.subr.mxu0 0.0
    %2023 = vmatpush1.msra.mxu0 %v1987
    %2024 = vmatprep.subr.mxu0 0.0
    %2025 = vmatpush1.msra.mxu0 %v1988
    %2026 = vmatprep.subr.mxu0 0.0
    %2027 = vmatpush1.msra.mxu0 %v1989
    %2028 = vmatprep.subr.mxu0 0.0
    %2029 = vmatpush1.msra.mxu0 %v1990
    %2030 = vmatprep.subr.mxu0 0.0
    %2031 = vmatpush1.msra.mxu0 0.0
    %2032 = vmatprep.subr.mxu0 0.0
    %2033 = vmatpush1.msra.mxu0 0.0
    %2034 = vmatprep.subr.mxu0 0.0
    %2035 = vmatpush1.msra.mxu0 0.0
    %2036 = vmatprep.subr.mxu0 0.0
    %2037 = vmatpush1.msra.mxu0 0.0
    %2038 = vmatprep.subr.mxu0 0.0
    %2039 = vmatpush1.msra.mxu0 0.0
    %2040 = vmatprep.subr.mxu0 0.0
    %2041 = vmatpush1.msra.mxu0 0.0
    %2042 = vmatprep.subr.mxu0 0.0
    %2043 = vmatpush1.msra.mxu0 0.0
    %2044 = vmatprep.subr.mxu0 0.0
    %2045 = vmatpush1.msra.mxu0 0.0
    %2046 = vmatprep.subr.mxu0 0.0
    %2047 = vmatpush1.msra.mxu0 0.0
    %2048 = vmatprep.subr.mxu0 0.0
    %2049 = vmatpush1.msra.mxu0 0.0
    %2050 = vmatprep.subr.mxu0 0.0
    %2051 = vmatpush1.msra.mxu0 0.0
    %2052 = vmatprep.subr.mxu0 0.0
    %2053 = vmatpush1.msra.mxu0 0.0
    %2054 = vmatprep.subr.mxu0 0.0
    %2055 = vmatpush1.msra.mxu0 0.0
    %2056 = vmatprep.subr.mxu0 0.0
    %2057 = vmatpush1.msra.mxu0 0.0
    %2058 = vmatprep.subr.mxu0 0.0
    %2059 = vmatpush1.msra.mxu0 0.0
    %2060 = vmatprep.subr.mxu0 0.0
    %2061 = vmatpush1.msra.mxu0 0.0
    %2062 = vmatprep.mubr.f32.mxu0 0.0
    %2063 = vmatmul.mubr.f32.gmra.mrb[0].mxu0 %v1973
    %v2064 = vpop.f32.mrb[0].mxu0
    %v2065 = vadd.f32 %v1996, %v2064
    %v2066 = vpop.f32.mrb[0].mxu0
    %2067 = vmatprep.mubr.f32.mxu0 0.0
    %2068 = vmatmul.mubr.f32.gmra.mrb[0].mxu0 %v1974
    %v2069 = vpop.f32.mrb[0].mxu0
    %v2070 = vadd.f32 %v1996, %v2069
    %v2071 = vpop.f32.mrb[0].mxu0
    %2072 = vdwg.mxu0
    %vm2073 = vcmp.gt.f32.partialorder %v2065, 0.0
    %vm2074 = vcmp.gt.f32.partialorder %v2070, 0.0
    %v2075 = vmul.f32 %v2065, 0.01
    %v2076 = vmul.f32 %v2070, 0.01
    %v2077 = vsel %vm2073, %v2065, %v2075
    %v2078 = vsel %vm2074, %v2070, %v2076
    %vm2079 = vcmask 130048
    %2080 = vst.msk [vmem:[#allocation7] sm:$0xff] %vm2079, %v2077
    %2081 = vst.msk [vmem:[#allocation7 + $0x8] sm:$0xff] %vm2079, %v2078
    // Predicated region
    $region38: #{tpu_custom_call.1} parent=1 // pred_check
      _
    $region39: #{tpu_custom_call.1} parent=1 // pred_check_branch
      %2083 = sbr.rel (0) target = $region41
    $region40: #{tpu_custom_call.1} parent=1 // pred_region
      %s2085 = ssub.s32 256, 256
      %2086 = vsyncadd [#allocation6], %s2085
      %s2087 = sshll.u32 [#allocation7], 4
      %s2088 = int_to_ptr.vmem [resolvable:$true] %s2087
      %2093 = dma.vmem_to_hbm [thread:$0]  %s2088, 256, %s7, [#allocation6], 128, 128, 8
    $region41: #{tpu_custom_call.1} parent=1 // pred_fallthru
      _
    // Predicated region
    $region42: #{tpu_custom_call.1} parent=1 // pred_check
      _
    $region43: #{tpu_custom_call.1} parent=1 // pred_check_branch
      %2095 = sbr.rel (0) target = $region45
    $region44: #{tpu_custom_call.1} parent=1 // pred_region
      %2096 = dma.done [#allocation6], 256
    $region45: #{tpu_custom_call.1} parent=1 // pred_fallthru
      _
    %2097 = vsyncpa [#allocation5], 1
    %2098 = vsyncpa [#allocation6], 1

</llo_original>
